<compile_context>
chip_gen: v5e
topology: v5e:2x2
jax: 0.10.0
libtpu: 0.0.40
codegen_flags: <defaults>
</compile_context>

<pallas_src>
import jax
import jax.numpy as jnp
from jax.experimental import pallas as pl
from jax.experimental.pallas import tpu as pltpu

# ----- module hyper-parameters (from the PyTorch script) -----
INPUT_SIZE = 1
HIDDEN = 10
NUM_LAYERS = 3
N_STEPS = 4            # n_steps -> output_size of the fc layer

# ----- packed kernel layout constants -----
HP = 16                # padded per-direction hidden width (lanes)
DP = 2 * HP            # fused state width: [fwd half | bwd half]
GB = 2 * HP            # one gate block: [gate_fwd(16) | gate_bwd(16)]
G = 4 * GB             # packed gate width: [i | f | g | o] = 128 lanes


def _round_up(v, m):
    return (v + m - 1) // m * m


# ---------------------------------------------------------------------------
# Fused Pallas kernel: full 3-layer bidirectional LSTM + fc in one call
# ---------------------------------------------------------------------------
def fused_bilstm_kernel(x_ref, w0_ref, wih_ref, whh_ref, b_ref,
                        fcw_ref, fcb_ref, out_ref):
    """
    x_ref:   (T, Bp, 1)        time-major input (input_size == 1)
    w0_ref:  (1, G)            layer-0 input->gate weights, both directions
    wih_ref: (L-1, 2, DP, G)   layer>=1 input->gate weights; index 1 selects
                               which half of the fused state feeds it
                               (0: fwd-feature rows live, 1: bwd-feature rows
                               live; the other half's rows are zero)
    whh_ref: (L, DP, G)        block-diagonal hidden->gate weights
    b_ref:   (L, 1, G)         combined bias (b_ih + b_hh), zero on pad lanes
    fcw_ref: (DP, N_STEPS)     fc weight (zero rows at padded lanes)
    fcb_ref: (1, N_STEPS)      fc bias
    out_ref: (Bp, N_STEPS)
    """
    T, Bp, _ = x_ref.shape
    L = whh_ref.shape[0]

    # ---- hoisted per-lane constants (computed once, loop invariant) ----
    lane = jax.lax.broadcasted_iota(jnp.int32, (1, G), 1)
    is_tanh_gate = (lane >= 2 * GB) & (lane < 3 * GB)      # the 'g' gate block
    # fused nonlinearity: a = alpha*tanh(alpha*z) + offset
    #   sigmoid(z) = 0.5*tanh(0.5*z) + 0.5  (i/f/o lanes), tanh(z) (g lanes)
    alpha = jnp.where(is_tanh_gate, 1.0, 0.5).astype(jnp.float32)
    offset = jnp.where(is_tanh_gate, 0.0, 0.5).astype(jnp.float32)
    fwd_gate = (lane & (GB - 1)) < HP                      # fwd-direction gate lanes
    lane_h = jax.lax.broadcasted_iota(jnp.int32, (1, DP), 1)
    fwd_half = lane_h < HP                                 # fwd half of fused state

    def run_layer(xp_time, whh, bias):
        """xp_time[t] = (Bp, G) input projection at time t (no bias).
        Runs the fused fwd+bwd recurrence; returns list hs where
        hs[s][:, :HP] = h_fwd at time s and hs[s][:, HP:] = h_bwd at time T-1-s."""
        # Per-super-step projection: at super-step s the fwd direction consumes
        # time s and the bwd direction consumes time T-1-s.  All selects are
        # outside the serial recurrence.
        xps = [jnp.where(fwd_gate, xp_time[s], xp_time[T - 1 - s]) + bias
               for s in range(T)]
        h = jnp.zeros((Bp, DP), jnp.float32)
        c = jnp.zeros((Bp, DP), jnp.float32)
        hs = [None] * T
        for s in range(T):                       # fully unrolled serial chain
            z = xps[s] + jnp.dot(h, whh, preferred_element_type=jnp.float32)
            a = alpha * jnp.tanh(alpha * z) + offset       # all 4 gates, 1 EUP op
            i_g = a[:, 0 * GB:1 * GB]
            f_g = a[:, 1 * GB:2 * GB]
            g_g = a[:, 2 * GB:3 * GB]
            o_g = a[:, 3 * GB:4 * GB]
            # Padded-lane invariant: z_pad == 0 (zero weight rows/cols + zero
            # bias) -> i/f/o = 0.5, g = 0 -> c_pad stays 0 and h_pad stays 0.
            c = f_g * c + i_g * g_g
            h = o_g * jnp.tanh(c)
            hs[s] = h
        return hs

    # ---------------- layer 0: input_size == 1 ---------------------------
    w0 = w0_ref[...]                                       # (1, G)
    xp_time = [x_ref[t] * w0 for t in range(T)]            # (Bp,1)*(1,G) -> (Bp,G)
    hs = run_layer(xp_time, whh_ref[0], b_ref[0])

    # ---------------- layers 1 .. L-1 ------------------------------------
    for l in range(1, L):
        HS = jnp.stack(hs, axis=0).reshape(T * Bp, DP)     # super-step major
        wf = wih_ref[l - 1, 0]                             # fwd-feature rows only
        wb = wih_ref[l - 1, 1]                             # bwd-feature rows only
        A = jnp.dot(HS, wf, preferred_element_type=jnp.float32).reshape(T, Bp, G)
        Bv = jnp.dot(HS, wb, preferred_element_type=jnp.float32).reshape(T, Bp, G)
        # A[s]  = contribution of h_fwd at time s
        # Bv[s] = contribution of h_bwd at time T-1-s
        # -> full input projection at time t (both halves at time t):
        xp_time = [A[t] + Bv[T - 1 - t] for t in range(T)]
        hs = run_layer(xp_time, whh_ref[l], b_ref[l])

    # ------- fc on out[:, -1, :] = [h_fwd[T-1] | h_bwd[T-1]] --------------
    last = jnp.where(fwd_half, hs[T - 1], hs[0])           # (Bp, DP)
    out_ref[...] = (jnp.dot(last, fcw_ref[...],
                            preferred_element_type=jnp.float32) + fcb_ref[...])


# ---------------------------------------------------------------------------
# Wrapper
# ---------------------------------------------------------------------------
def lstm_predictor_forward(x, packed):
    """Mirror of LSTMPredictor.forward: x is (B, T, INPUT_SIZE) batch-first."""
    B, T, _ = x.shape
    Bp = _round_up(max(B, 8), 8)
    # Only prep left outside the kernel: a 256-byte axis swap (and a tiny batch
    # pad if B is not a sublane multiple).  The old (T, Bp, DP) zero-scatter is
    # gone — layer 0 is handled in-kernel as a broadcast-multiply.
    x_tm = jnp.swapaxes(x, 0, 1).astype(jnp.float32)       # (T, B, 1)
    if Bp != B:
        x_tm = jnp.pad(x_tm, ((0, 0), (0, Bp - B), (0, 0)))

    out = pl.pallas_call(
        fused_bilstm_kernel,
        out_shape=jax.ShapeDtypeStruct((Bp, N_STEPS), jnp.float32),
        in_specs=[pl.BlockSpec(memory_space=pltpu.MemorySpace.VMEM)] * 7,
        out_specs=pl.BlockSpec(memory_space=pltpu.MemorySpace.VMEM),
    )(x_tm, packed["w0"], packed["wih"], packed["whh"], packed["b"],
      packed["fc_w"], packed["fc_b"])
    return out[:B]


# ---------------------------------------------------------------------------
# Parameter init (PyTorch-style U(-1/sqrt(H), 1/sqrt(H))) + packing
# ---------------------------------------------------------------------------
def init_params(key):
    """Logical (unpadded) parameters, gate order (i, f, g, o)."""
    logical = {}
    k = 1.0 / float(HIDDEN) ** 0.5
    for l in range(NUM_LAYERS):
        d_in = INPUT_SIZE if l == 0 else 2 * HIDDEN
        for dname in ("fwd", "bwd"):
            key, k1, k2, k3, k4 = jax.random.split(key, 5)
            wih = jax.random.uniform(k1, (4, d_in, HIDDEN), jnp.float32, -k, k)
            whh = jax.random.uniform(k2, (4, HIDDEN, HIDDEN), jnp.float32, -k, k)
            b_ih = jax.random.uniform(k3, (4, 1, HIDDEN), jnp.float32, -k, k)
            b_hh = jax.random.uniform(k4, (4, 1, HIDDEN), jnp.float32, -k, k)
            logical[(l, dname)] = {"wih": wih, "whh": whh, "b": b_ih + b_hh}
    key, kw, kb = jax.random.split(key, 3)
    kfc = 1.0 / float(2 * HIDDEN) ** 0.5
    logical["fc_w"] = jax.random.uniform(kw, (2 * HIDDEN, N_STEPS),
                                         jnp.float32, -kfc, kfc)
    logical["fc_b"] = jax.random.uniform(kb, (1, N_STEPS), jnp.float32, -kfc, kfc)
    return logical


def pack_params(logical):
    """Scatter logical weights into the fused, lane-padded kernel layout.

    Fused gate columns: col(gate g, direction d) = g*GB + d*HP.
    Fused state rows:   fwd h at rows 0:HP, bwd h at rows HP:DP.
    """
    w0 = jnp.zeros((1, G), jnp.float32)
    wih = jnp.zeros((NUM_LAYERS - 1, 2, DP, G), jnp.float32)
    whh = jnp.zeros((NUM_LAYERS, DP, G), jnp.float32)
    b = jnp.zeros((NUM_LAYERS, 1, G), jnp.float32)
    for l in range(NUM_LAYERS):
        for d, dname in enumerate(("fwd", "bwd")):
            p = logical[(l, dname)]
            r0 = d * HP
            for g in range(4):
                c0 = g * GB + d * HP
                # block-diagonal hidden->gate weights
                whh = whh.at[l, r0:r0 + HIDDEN, c0:c0 + HIDDEN].set(p["whh"][g])
                b = b.at[l, 0, c0:c0 + HIDDEN].set(p["b"][g, 0])
                if l == 0:
                    w0 = w0.at[0, c0:c0 + HIDDEN].set(p["wih"][g][0])
                else:
                    # split by which half of the previous layer's output feeds it
                    wih = wih.at[l - 1, 0, 0:HIDDEN,
                                 c0:c0 + HIDDEN].set(p["wih"][g][:HIDDEN])
                    wih = wih.at[l - 1, 1, HP:HP + HIDDEN,
                                 c0:c0 + HIDDEN].set(p["wih"][g][HIDDEN:])
    fc_w = jnp.zeros((DP, N_STEPS), jnp.float32)
    fc_w = fc_w.at[:HIDDEN].set(logical["fc_w"][:HIDDEN])
    fc_w = fc_w.at[HP:HP + HIDDEN].set(logical["fc_w"][HIDDEN:])
    return {"w0": w0, "wih": wih, "whh": whh, "b": b,
            "fc_w": fc_w, "fc_b": logical["fc_b"]}


# ---------------------------------------------------------------------------
# Pure-JAX reference (logical weights) for correctness check
# ---------------------------------------------------------------------------
def _lstm_layer_ref(x_tm, p):
    T, B, _ = x_tm.shape
    h = jnp.zeros((B, HIDDEN), jnp.float32)
    c = jnp.zeros((B, HIDDEN), jnp.float32)
    outs = []
    for t in range(T):
        x_t = x_tm[t]
        gates = [x_t @ p["wih"][g] + h @ p["whh"][g] + p["b"][g] for g in range(4)]
        i_g = jax.nn.sigmoid(gates[0])
        f_g = jax.nn.sigmoid(gates[1])
        g_g = jnp.tanh(gates[2])
        o_g = jax.nn.sigmoid(gates[3])
        c = f_g * c + i_g * g_g
        h = o_g * jnp.tanh(c)
        outs.append(h)
    return jnp.stack(outs)


def lstm_predictor_ref(x, logical):
    x_tm = jnp.transpose(x, (1, 0, 2)).astype(jnp.float32)
    layer_in = x_tm
    for l in range(NUM_LAYERS):
        hf = _lstm_layer_ref(layer_in, logical[(l, "fwd")])
        hb = _lstm_layer_ref(layer_in[::-1], logical[(l, "bwd")])[::-1]
        layer_in = jnp.concatenate([hf, hb], axis=-1)
    return layer_in[-1] @ logical["fc_w"] + logical["fc_b"]


# ---------------------------------------------------------------------------
if __name__ == "__main__":
    T = 8
    logical = init_params(jax.random.PRNGKey(1))
    packed = pack_params(logical)
    fwd = jax.jit(lstm_predictor_forward)

    for B in (8, 4):   # sublane-aligned batch and padded-batch path
        x = jax.random.normal(jax.random.PRNGKey(0), (B, T, INPUT_SIZE),
                              dtype=jnp.float32)
        out = jax.block_until_ready(fwd(x, packed))
        assert out.shape == (B, N_STEPS), out.shape
        with jax.default_matmul_precision("float32"):
            ref = lstm_predictor_ref(x, logical)
        max_diff = jnp.max(jnp.abs(out - ref))
        assert jnp.allclose(out, ref, atol=2e-3, rtol=2e-3), \
            f"B={B} max diff {max_diff}"

    print("KERNEL_OK")
</pallas_src>

<mosaic_0001>
module attributes {stable_mosaic.version = 11 : i64} {
  func.func @fused_bilstm_kernel(%arg0: memref<8x8x1xf32, #tpu.memory_space<vmem>>, %arg1: memref<1x128xf32, #tpu.memory_space<vmem>>, %arg2: memref<2x2x32x128xf32, #tpu.memory_space<vmem>>, %arg3: memref<3x32x128xf32, #tpu.memory_space<vmem>>, %arg4: memref<3x1x128xf32, #tpu.memory_space<vmem>>, %arg5: memref<32x4xf32, #tpu.memory_space<vmem>>, %arg6: memref<1x4xf32, #tpu.memory_space<vmem>>, %arg7: memref<8x4xf32, #tpu.memory_space<vmem>>) attributes {dimension_semantics = [], scalar_prefetch = 0 : i64, scratch_operands = 0 : i64, tpu.core_type = #tpu.core_type<tc>} {
    %0 = tpu.iota {dimensions = array<i32: 1>} : vector<1x128xi32>
    %c64_i32 = arith.constant 64 : i32
    %1 = vector.broadcast %c64_i32 : i32 to vector<1x128xi32>
    %2 = arith.cmpi sge, %0, %1 : vector<1x128xi32>
    %c96_i32 = arith.constant 96 : i32
    %3 = vector.broadcast %c96_i32 : i32 to vector<1x128xi32>
    %4 = arith.cmpi slt, %0, %3 : vector<1x128xi32>
    %5 = arith.andi %2, %4 : vector<1x128xi1>
    %cst = arith.constant 1.000000e+00 : f32
    %cst_0 = arith.constant 5.000000e-01 : f32
    %6 = vector.broadcast %cst : f32 to vector<1x128xf32>
    %7 = vector.broadcast %cst_0 : f32 to vector<1x128xf32>
    %8 = arith.select %5, %6, %7 : vector<1x128xi1>, vector<1x128xf32>
    %cst_1 = arith.constant 0.000000e+00 : f32
    %cst_2 = arith.constant 5.000000e-01 : f32
    %9 = vector.broadcast %cst_1 : f32 to vector<1x128xf32>
    %10 = vector.broadcast %cst_2 : f32 to vector<1x128xf32>
    %11 = arith.select %5, %9, %10 : vector<1x128xi1>, vector<1x128xf32>
    %c31_i32 = arith.constant 31 : i32
    %12 = vector.broadcast %c31_i32 : i32 to vector<1x128xi32>
    %13 = arith.andi %0, %12 : vector<1x128xi32>
    %c16_i32 = arith.constant 16 : i32
    %14 = vector.broadcast %c16_i32 : i32 to vector<1x128xi32>
    %15 = arith.cmpi slt, %13, %14 : vector<1x128xi32>
    %16 = tpu.iota {dimensions = array<i32: 1>} : vector<1x32xi32>
    %c16_i32_3 = arith.constant 16 : i32
    %17 = vector.broadcast %c16_i32_3 : i32 to vector<1x32xi32>
    %18 = arith.cmpi slt, %16, %17 : vector<1x32xi32>
    %c0 = arith.constant 0 : index
    %c0_4 = arith.constant 0 : index
    %19 = vector.load %arg1[%c0, %c0_4] : memref<1x128xf32, #tpu.memory_space<vmem>>, vector<1x128xf32>
    %c0_5 = arith.constant 0 : index
    %c0_6 = arith.constant 0 : index
    %c0_7 = arith.constant 0 : index
    %20 = vector.load %arg0[%c0_5, %c0_6, %c0_7] : memref<8x8x1xf32, #tpu.memory_space<vmem>>, vector<1x8x1xf32>
    %21 = vector.shape_cast %20 : vector<1x8x1xf32> to vector<8x1xf32>
    %22 = vector.broadcast %21 : vector<8x1xf32> to vector<8x128xf32>
    %23 = vector.broadcast %19 : vector<1x128xf32> to vector<8x128xf32>
    %24 = arith.mulf %22, %23 : vector<8x128xf32>
    %c1 = arith.constant 1 : index
    %c0_8 = arith.constant 0 : index
    %c0_9 = arith.constant 0 : index
    %25 = vector.load %arg0[%c1, %c0_8, %c0_9] : memref<8x8x1xf32, #tpu.memory_space<vmem>>, vector<1x8x1xf32>
    %26 = vector.shape_cast %25 : vector<1x8x1xf32> to vector<8x1xf32>
    %27 = vector.broadcast %26 : vector<8x1xf32> to vector<8x128xf32>
    %28 = vector.broadcast %19 : vector<1x128xf32> to vector<8x128xf32>
    %29 = arith.mulf %27, %28 : vector<8x128xf32>
    %c2 = arith.constant 2 : index
    %c0_10 = arith.constant 0 : index
    %c0_11 = arith.constant 0 : index
    %30 = vector.load %arg0[%c2, %c0_10, %c0_11] : memref<8x8x1xf32, #tpu.memory_space<vmem>>, vector<1x8x1xf32>
    %31 = vector.shape_cast %30 : vector<1x8x1xf32> to vector<8x1xf32>
    %32 = vector.broadcast %31 : vector<8x1xf32> to vector<8x128xf32>
    %33 = vector.broadcast %19 : vector<1x128xf32> to vector<8x128xf32>
    %34 = arith.mulf %32, %33 : vector<8x128xf32>
    %c3 = arith.constant 3 : index
    %c0_12 = arith.constant 0 : index
    %c0_13 = arith.constant 0 : index
    %35 = vector.load %arg0[%c3, %c0_12, %c0_13] : memref<8x8x1xf32, #tpu.memory_space<vmem>>, vector<1x8x1xf32>
    %36 = vector.shape_cast %35 : vector<1x8x1xf32> to vector<8x1xf32>
    %37 = vector.broadcast %36 : vector<8x1xf32> to vector<8x128xf32>
    %38 = vector.broadcast %19 : vector<1x128xf32> to vector<8x128xf32>
    %39 = arith.mulf %37, %38 : vector<8x128xf32>
    %c4 = arith.constant 4 : index
    %c0_14 = arith.constant 0 : index
    %c0_15 = arith.constant 0 : index
    %40 = vector.load %arg0[%c4, %c0_14, %c0_15] : memref<8x8x1xf32, #tpu.memory_space<vmem>>, vector<1x8x1xf32>
    %41 = vector.shape_cast %40 : vector<1x8x1xf32> to vector<8x1xf32>
    %42 = vector.broadcast %41 : vector<8x1xf32> to vector<8x128xf32>
    %43 = vector.broadcast %19 : vector<1x128xf32> to vector<8x128xf32>
    %44 = arith.mulf %42, %43 : vector<8x128xf32>
    %c5 = arith.constant 5 : index
    %c0_16 = arith.constant 0 : index
    %c0_17 = arith.constant 0 : index
    %45 = vector.load %arg0[%c5, %c0_16, %c0_17] : memref<8x8x1xf32, #tpu.memory_space<vmem>>, vector<1x8x1xf32>
    %46 = vector.shape_cast %45 : vector<1x8x1xf32> to vector<8x1xf32>
    %47 = vector.broadcast %46 : vector<8x1xf32> to vector<8x128xf32>
    %48 = vector.broadcast %19 : vector<1x128xf32> to vector<8x128xf32>
    %49 = arith.mulf %47, %48 : vector<8x128xf32>
    %c6 = arith.constant 6 : index
    %c0_18 = arith.constant 0 : index
    %c0_19 = arith.constant 0 : index
    %50 = vector.load %arg0[%c6, %c0_18, %c0_19] : memref<8x8x1xf32, #tpu.memory_space<vmem>>, vector<1x8x1xf32>
    %51 = vector.shape_cast %50 : vector<1x8x1xf32> to vector<8x1xf32>
    %52 = vector.broadcast %51 : vector<8x1xf32> to vector<8x128xf32>
    %53 = vector.broadcast %19 : vector<1x128xf32> to vector<8x128xf32>
    %54 = arith.mulf %52, %53 : vector<8x128xf32>
    %c7 = arith.constant 7 : index
    %c0_20 = arith.constant 0 : index
    %c0_21 = arith.constant 0 : index
    %55 = vector.load %arg0[%c7, %c0_20, %c0_21] : memref<8x8x1xf32, #tpu.memory_space<vmem>>, vector<1x8x1xf32>
    %56 = vector.shape_cast %55 : vector<1x8x1xf32> to vector<8x1xf32>
    %57 = vector.broadcast %56 : vector<8x1xf32> to vector<8x128xf32>
    %58 = vector.broadcast %19 : vector<1x128xf32> to vector<8x128xf32>
    %59 = arith.mulf %57, %58 : vector<8x128xf32>
    %c0_22 = arith.constant 0 : index
    %c0_23 = arith.constant 0 : index
    %c0_24 = arith.constant 0 : index
    %60 = vector.load %arg3[%c0_22, %c0_23, %c0_24] : memref<3x32x128xf32, #tpu.memory_space<vmem>>, vector<1x32x128xf32>
    %61 = vector.shape_cast %60 : vector<1x32x128xf32> to vector<32x128xf32>
    %c0_25 = arith.constant 0 : index
    %c0_26 = arith.constant 0 : index
    %c0_27 = arith.constant 0 : index
    %62 = vector.load %arg4[%c0_25, %c0_26, %c0_27] : memref<3x1x128xf32, #tpu.memory_space<vmem>>, vector<1x1x128xf32>
    %63 = vector.shape_cast %62 : vector<1x1x128xf32> to vector<1x128xf32>
    %64 = vector.shape_cast %15 : vector<1x128xi1> to vector<1x128xi1>
    %65 = vector.broadcast %64 : vector<1x128xi1> to vector<8x128xi1>
    %66 = arith.select %65, %24, %59 : vector<8x128xi1>, vector<8x128xf32>
    %67 = vector.broadcast %63 : vector<1x128xf32> to vector<8x128xf32>
    %68 = arith.addf %66, %67 : vector<8x128xf32>
    %69 = vector.shape_cast %15 : vector<1x128xi1> to vector<1x128xi1>
    %70 = vector.broadcast %69 : vector<1x128xi1> to vector<8x128xi1>
    %71 = arith.select %70, %29, %54 : vector<8x128xi1>, vector<8x128xf32>
    %72 = vector.broadcast %63 : vector<1x128xf32> to vector<8x128xf32>
    %73 = arith.addf %71, %72 : vector<8x128xf32>
    %74 = vector.shape_cast %15 : vector<1x128xi1> to vector<1x128xi1>
    %75 = vector.broadcast %74 : vector<1x128xi1> to vector<8x128xi1>
    %76 = arith.select %75, %34, %49 : vector<8x128xi1>, vector<8x128xf32>
    %77 = vector.broadcast %63 : vector<1x128xf32> to vector<8x128xf32>
    %78 = arith.addf %76, %77 : vector<8x128xf32>
    %79 = vector.shape_cast %15 : vector<1x128xi1> to vector<1x128xi1>
    %80 = vector.broadcast %79 : vector<1x128xi1> to vector<8x128xi1>
    %81 = arith.select %80, %39, %44 : vector<8x128xi1>, vector<8x128xf32>
    %82 = vector.broadcast %63 : vector<1x128xf32> to vector<8x128xf32>
    %83 = arith.addf %81, %82 : vector<8x128xf32>
    %84 = vector.shape_cast %15 : vector<1x128xi1> to vector<1x128xi1>
    %85 = vector.broadcast %84 : vector<1x128xi1> to vector<8x128xi1>
    %86 = arith.select %85, %44, %39 : vector<8x128xi1>, vector<8x128xf32>
    %87 = vector.broadcast %63 : vector<1x128xf32> to vector<8x128xf32>
    %88 = arith.addf %86, %87 : vector<8x128xf32>
    %89 = vector.shape_cast %15 : vector<1x128xi1> to vector<1x128xi1>
    %90 = vector.broadcast %89 : vector<1x128xi1> to vector<8x128xi1>
    %91 = arith.select %90, %49, %34 : vector<8x128xi1>, vector<8x128xf32>
    %92 = vector.broadcast %63 : vector<1x128xf32> to vector<8x128xf32>
    %93 = arith.addf %91, %92 : vector<8x128xf32>
    %94 = vector.shape_cast %15 : vector<1x128xi1> to vector<1x128xi1>
    %95 = vector.broadcast %94 : vector<1x128xi1> to vector<8x128xi1>
    %96 = arith.select %95, %54, %29 : vector<8x128xi1>, vector<8x128xf32>
    %97 = vector.broadcast %63 : vector<1x128xf32> to vector<8x128xf32>
    %98 = arith.addf %96, %97 : vector<8x128xf32>
    %99 = vector.shape_cast %15 : vector<1x128xi1> to vector<1x128xi1>
    %100 = vector.broadcast %99 : vector<1x128xi1> to vector<8x128xi1>
    %101 = arith.select %100, %59, %24 : vector<8x128xi1>, vector<8x128xf32>
    %102 = vector.broadcast %63 : vector<1x128xf32> to vector<8x128xf32>
    %103 = arith.addf %101, %102 : vector<8x128xf32>
    %cst_28 = arith.constant 0.000000e+00 : f32
    %104 = vector.broadcast %cst_28 : f32 to vector<8x32xf32>
    %cst_29 = arith.constant 0.000000e+00 : f32
    %105 = vector.broadcast %cst_29 : f32 to vector<8x32xf32>
    %cst_30 = arith.constant dense<0.000000e+00> : vector<8x128xf32>
    %106 = tpu.matmul %104, %61, %cst_30 {dimension_numbers = #tpu.dot_dimension_numbers<[1], [0], [0], [1], [0, 0, 1, 1], [], []>} : vector<8x32xf32>, vector<32x128xf32>, vector<8x128xf32> -> vector<8x128xf32>
    %107 = arith.addf %68, %106 : vector<8x128xf32>
    %108 = vector.broadcast %8 : vector<1x128xf32> to vector<8x128xf32>
    %109 = arith.mulf %108, %107 : vector<8x128xf32>
    %110 = math.tanh %109 : vector<8x128xf32>
    %111 = vector.broadcast %8 : vector<1x128xf32> to vector<8x128xf32>
    %112 = arith.mulf %111, %110 : vector<8x128xf32>
    %113 = vector.broadcast %11 : vector<1x128xf32> to vector<8x128xf32>
    %114 = arith.addf %112, %113 : vector<8x128xf32>
    %115 = vector.extract_strided_slice %114 {offsets = [0, 0], sizes = [8, 32], strides = [1, 1]} : vector<8x128xf32> to vector<8x32xf32>
    %116 = vector.extract_strided_slice %114 {offsets = [0, 32], sizes = [8, 32], strides = [1, 1]} : vector<8x128xf32> to vector<8x32xf32>
    %117 = vector.extract_strided_slice %114 {offsets = [0, 64], sizes = [8, 32], strides = [1, 1]} : vector<8x128xf32> to vector<8x32xf32>
    %118 = vector.extract_strided_slice %114 {offsets = [0, 96], sizes = [8, 32], strides = [1, 1]} : vector<8x128xf32> to vector<8x32xf32>
    %119 = arith.mulf %116, %105 : vector<8x32xf32>
    %120 = arith.mulf %115, %117 : vector<8x32xf32>
    %121 = arith.addf %119, %120 : vector<8x32xf32>
    %122 = math.tanh %121 : vector<8x32xf32>
    %123 = arith.mulf %118, %122 : vector<8x32xf32>
    %cst_31 = arith.constant dense<0.000000e+00> : vector<8x128xf32>
    %124 = tpu.matmul %123, %61, %cst_31 {dimension_numbers = #tpu.dot_dimension_numbers<[1], [0], [0], [1], [0, 0, 1, 1], [], []>} : vector<8x32xf32>, vector<32x128xf32>, vector<8x128xf32> -> vector<8x128xf32>
    %125 = arith.addf %73, %124 : vector<8x128xf32>
    %126 = vector.broadcast %8 : vector<1x128xf32> to vector<8x128xf32>
    %127 = arith.mulf %126, %125 : vector<8x128xf32>
    %128 = math.tanh %127 : vector<8x128xf32>
    %129 = vector.broadcast %8 : vector<1x128xf32> to vector<8x128xf32>
    %130 = arith.mulf %129, %128 : vector<8x128xf32>
    %131 = vector.broadcast %11 : vector<1x128xf32> to vector<8x128xf32>
    %132 = arith.addf %130, %131 : vector<8x128xf32>
    %133 = vector.extract_strided_slice %132 {offsets = [0, 0], sizes = [8, 32], strides = [1, 1]} : vector<8x128xf32> to vector<8x32xf32>
    %134 = vector.extract_strided_slice %132 {offsets = [0, 32], sizes = [8, 32], strides = [1, 1]} : vector<8x128xf32> to vector<8x32xf32>
    %135 = vector.extract_strided_slice %132 {offsets = [0, 64], sizes = [8, 32], strides = [1, 1]} : vector<8x128xf32> to vector<8x32xf32>
    %136 = vector.extract_strided_slice %132 {offsets = [0, 96], sizes = [8, 32], strides = [1, 1]} : vector<8x128xf32> to vector<8x32xf32>
    %137 = arith.mulf %134, %121 : vector<8x32xf32>
    %138 = arith.mulf %133, %135 : vector<8x32xf32>
    %139 = arith.addf %137, %138 : vector<8x32xf32>
    %140 = math.tanh %139 : vector<8x32xf32>
    %141 = arith.mulf %136, %140 : vector<8x32xf32>
    %cst_32 = arith.constant dense<0.000000e+00> : vector<8x128xf32>
    %142 = tpu.matmul %141, %61, %cst_32 {dimension_numbers = #tpu.dot_dimension_numbers<[1], [0], [0], [1], [0, 0, 1, 1], [], []>} : vector<8x32xf32>, vector<32x128xf32>, vector<8x128xf32> -> vector<8x128xf32>
    %143 = arith.addf %78, %142 : vector<8x128xf32>
    %144 = vector.broadcast %8 : vector<1x128xf32> to vector<8x128xf32>
    %145 = arith.mulf %144, %143 : vector<8x128xf32>
    %146 = math.tanh %145 : vector<8x128xf32>
    %147 = vector.broadcast %8 : vector<1x128xf32> to vector<8x128xf32>
    %148 = arith.mulf %147, %146 : vector<8x128xf32>
    %149 = vector.broadcast %11 : vector<1x128xf32> to vector<8x128xf32>
    %150 = arith.addf %148, %149 : vector<8x128xf32>
    %151 = vector.extract_strided_slice %150 {offsets = [0, 0], sizes = [8, 32], strides = [1, 1]} : vector<8x128xf32> to vector<8x32xf32>
    %152 = vector.extract_strided_slice %150 {offsets = [0, 32], sizes = [8, 32], strides = [1, 1]} : vector<8x128xf32> to vector<8x32xf32>
    %153 = vector.extract_strided_slice %150 {offsets = [0, 64], sizes = [8, 32], strides = [1, 1]} : vector<8x128xf32> to vector<8x32xf32>
    %154 = vector.extract_strided_slice %150 {offsets = [0, 96], sizes = [8, 32], strides = [1, 1]} : vector<8x128xf32> to vector<8x32xf32>
    %155 = arith.mulf %152, %139 : vector<8x32xf32>
    %156 = arith.mulf %151, %153 : vector<8x32xf32>
    %157 = arith.addf %155, %156 : vector<8x32xf32>
    %158 = math.tanh %157 : vector<8x32xf32>
    %159 = arith.mulf %154, %158 : vector<8x32xf32>
    %cst_33 = arith.constant dense<0.000000e+00> : vector<8x128xf32>
    %160 = tpu.matmul %159, %61, %cst_33 {dimension_numbers = #tpu.dot_dimension_numbers<[1], [0], [0], [1], [0, 0, 1, 1], [], []>} : vector<8x32xf32>, vector<32x128xf32>, vector<8x128xf32> -> vector<8x128xf32>
    %161 = arith.addf %83, %160 : vector<8x128xf32>
    %162 = vector.broadcast %8 : vector<1x128xf32> to vector<8x128xf32>
    %163 = arith.mulf %162, %161 : vector<8x128xf32>
    %164 = math.tanh %163 : vector<8x128xf32>
    %165 = vector.broadcast %8 : vector<1x128xf32> to vector<8x128xf32>
    %166 = arith.mulf %165, %164 : vector<8x128xf32>
    %167 = vector.broadcast %11 : vector<1x128xf32> to vector<8x128xf32>
    %168 = arith.addf %166, %167 : vector<8x128xf32>
    %169 = vector.extract_strided_slice %168 {offsets = [0, 0], sizes = [8, 32], strides = [1, 1]} : vector<8x128xf32> to vector<8x32xf32>
    %170 = vector.extract_strided_slice %168 {offsets = [0, 32], sizes = [8, 32], strides = [1, 1]} : vector<8x128xf32> to vector<8x32xf32>
    %171 = vector.extract_strided_slice %168 {offsets = [0, 64], sizes = [8, 32], strides = [1, 1]} : vector<8x128xf32> to vector<8x32xf32>
    %172 = vector.extract_strided_slice %168 {offsets = [0, 96], sizes = [8, 32], strides = [1, 1]} : vector<8x128xf32> to vector<8x32xf32>
    %173 = arith.mulf %170, %157 : vector<8x32xf32>
    %174 = arith.mulf %169, %171 : vector<8x32xf32>
    %175 = arith.addf %173, %174 : vector<8x32xf32>
    %176 = math.tanh %175 : vector<8x32xf32>
    %177 = arith.mulf %172, %176 : vector<8x32xf32>
    %cst_34 = arith.constant dense<0.000000e+00> : vector<8x128xf32>
    %178 = tpu.matmul %177, %61, %cst_34 {dimension_numbers = #tpu.dot_dimension_numbers<[1], [0], [0], [1], [0, 0, 1, 1], [], []>} : vector<8x32xf32>, vector<32x128xf32>, vector<8x128xf32> -> vector<8x128xf32>
    %179 = arith.addf %88, %178 : vector<8x128xf32>
    %180 = vector.broadcast %8 : vector<1x128xf32> to vector<8x128xf32>
    %181 = arith.mulf %180, %179 : vector<8x128xf32>
    %182 = math.tanh %181 : vector<8x128xf32>
    %183 = vector.broadcast %8 : vector<1x128xf32> to vector<8x128xf32>
    %184 = arith.mulf %183, %182 : vector<8x128xf32>
    %185 = vector.broadcast %11 : vector<1x128xf32> to vector<8x128xf32>
    %186 = arith.addf %184, %185 : vector<8x128xf32>
    %187 = vector.extract_strided_slice %186 {offsets = [0, 0], sizes = [8, 32], strides = [1, 1]} : vector<8x128xf32> to vector<8x32xf32>
    %188 = vector.extract_strided_slice %186 {offsets = [0, 32], sizes = [8, 32], strides = [1, 1]} : vector<8x128xf32> to vector<8x32xf32>
    %189 = vector.extract_strided_slice %186 {offsets = [0, 64], sizes = [8, 32], strides = [1, 1]} : vector<8x128xf32> to vector<8x32xf32>
    %190 = vector.extract_strided_slice %186 {offsets = [0, 96], sizes = [8, 32], strides = [1, 1]} : vector<8x128xf32> to vector<8x32xf32>
    %191 = arith.mulf %188, %175 : vector<8x32xf32>
    %192 = arith.mulf %187, %189 : vector<8x32xf32>
    %193 = arith.addf %191, %192 : vector<8x32xf32>
    %194 = math.tanh %193 : vector<8x32xf32>
    %195 = arith.mulf %190, %194 : vector<8x32xf32>
    %cst_35 = arith.constant dense<0.000000e+00> : vector<8x128xf32>
    %196 = tpu.matmul %195, %61, %cst_35 {dimension_numbers = #tpu.dot_dimension_numbers<[1], [0], [0], [1], [0, 0, 1, 1], [], []>} : vector<8x32xf32>, vector<32x128xf32>, vector<8x128xf32> -> vector<8x128xf32>
    %197 = arith.addf %93, %196 : vector<8x128xf32>
    %198 = vector.broadcast %8 : vector<1x128xf32> to vector<8x128xf32>
    %199 = arith.mulf %198, %197 : vector<8x128xf32>
    %200 = math.tanh %199 : vector<8x128xf32>
    %201 = vector.broadcast %8 : vector<1x128xf32> to vector<8x128xf32>
    %202 = arith.mulf %201, %200 : vector<8x128xf32>
    %203 = vector.broadcast %11 : vector<1x128xf32> to vector<8x128xf32>
    %204 = arith.addf %202, %203 : vector<8x128xf32>
    %205 = vector.extract_strided_slice %204 {offsets = [0, 0], sizes = [8, 32], strides = [1, 1]} : vector<8x128xf32> to vector<8x32xf32>
    %206 = vector.extract_strided_slice %204 {offsets = [0, 32], sizes = [8, 32], strides = [1, 1]} : vector<8x128xf32> to vector<8x32xf32>
    %207 = vector.extract_strided_slice %204 {offsets = [0, 64], sizes = [8, 32], strides = [1, 1]} : vector<8x128xf32> to vector<8x32xf32>
    %208 = vector.extract_strided_slice %204 {offsets = [0, 96], sizes = [8, 32], strides = [1, 1]} : vector<8x128xf32> to vector<8x32xf32>
    %209 = arith.mulf %206, %193 : vector<8x32xf32>
    %210 = arith.mulf %205, %207 : vector<8x32xf32>
    %211 = arith.addf %209, %210 : vector<8x32xf32>
    %212 = math.tanh %211 : vector<8x32xf32>
    %213 = arith.mulf %208, %212 : vector<8x32xf32>
    %cst_36 = arith.constant dense<0.000000e+00> : vector<8x128xf32>
    %214 = tpu.matmul %213, %61, %cst_36 {dimension_numbers = #tpu.dot_dimension_numbers<[1], [0], [0], [1], [0, 0, 1, 1], [], []>} : vector<8x32xf32>, vector<32x128xf32>, vector<8x128xf32> -> vector<8x128xf32>
    %215 = arith.addf %98, %214 : vector<8x128xf32>
    %216 = vector.broadcast %8 : vector<1x128xf32> to vector<8x128xf32>
    %217 = arith.mulf %216, %215 : vector<8x128xf32>
    %218 = math.tanh %217 : vector<8x128xf32>
    %219 = vector.broadcast %8 : vector<1x128xf32> to vector<8x128xf32>
    %220 = arith.mulf %219, %218 : vector<8x128xf32>
    %221 = vector.broadcast %11 : vector<1x128xf32> to vector<8x128xf32>
    %222 = arith.addf %220, %221 : vector<8x128xf32>
    %223 = vector.extract_strided_slice %222 {offsets = [0, 0], sizes = [8, 32], strides = [1, 1]} : vector<8x128xf32> to vector<8x32xf32>
    %224 = vector.extract_strided_slice %222 {offsets = [0, 32], sizes = [8, 32], strides = [1, 1]} : vector<8x128xf32> to vector<8x32xf32>
    %225 = vector.extract_strided_slice %222 {offsets = [0, 64], sizes = [8, 32], strides = [1, 1]} : vector<8x128xf32> to vector<8x32xf32>
    %226 = vector.extract_strided_slice %222 {offsets = [0, 96], sizes = [8, 32], strides = [1, 1]} : vector<8x128xf32> to vector<8x32xf32>
    %227 = arith.mulf %224, %211 : vector<8x32xf32>
    %228 = arith.mulf %223, %225 : vector<8x32xf32>
    %229 = arith.addf %227, %228 : vector<8x32xf32>
    %230 = math.tanh %229 : vector<8x32xf32>
    %231 = arith.mulf %226, %230 : vector<8x32xf32>
    %cst_37 = arith.constant dense<0.000000e+00> : vector<8x128xf32>
    %232 = tpu.matmul %231, %61, %cst_37 {dimension_numbers = #tpu.dot_dimension_numbers<[1], [0], [0], [1], [0, 0, 1, 1], [], []>} : vector<8x32xf32>, vector<32x128xf32>, vector<8x128xf32> -> vector<8x128xf32>
    %233 = arith.addf %103, %232 : vector<8x128xf32>
    %234 = vector.broadcast %8 : vector<1x128xf32> to vector<8x128xf32>
    %235 = arith.mulf %234, %233 : vector<8x128xf32>
    %236 = math.tanh %235 : vector<8x128xf32>
    %237 = vector.broadcast %8 : vector<1x128xf32> to vector<8x128xf32>
    %238 = arith.mulf %237, %236 : vector<8x128xf32>
    %239 = vector.broadcast %11 : vector<1x128xf32> to vector<8x128xf32>
    %240 = arith.addf %238, %239 : vector<8x128xf32>
    %241 = vector.extract_strided_slice %240 {offsets = [0, 0], sizes = [8, 32], strides = [1, 1]} : vector<8x128xf32> to vector<8x32xf32>
    %242 = vector.extract_strided_slice %240 {offsets = [0, 32], sizes = [8, 32], strides = [1, 1]} : vector<8x128xf32> to vector<8x32xf32>
    %243 = vector.extract_strided_slice %240 {offsets = [0, 64], sizes = [8, 32], strides = [1, 1]} : vector<8x128xf32> to vector<8x32xf32>
    %244 = vector.extract_strided_slice %240 {offsets = [0, 96], sizes = [8, 32], strides = [1, 1]} : vector<8x128xf32> to vector<8x32xf32>
    %245 = arith.mulf %242, %229 : vector<8x32xf32>
    %246 = arith.mulf %241, %243 : vector<8x32xf32>
    %247 = arith.addf %245, %246 : vector<8x32xf32>
    %248 = math.tanh %247 : vector<8x32xf32>
    %249 = arith.mulf %244, %248 : vector<8x32xf32>
    %250 = vector.shape_cast %123 : vector<8x32xf32> to vector<1x8x32xf32>
    %251 = vector.shape_cast %141 : vector<8x32xf32> to vector<1x8x32xf32>
    %252 = vector.shape_cast %159 : vector<8x32xf32> to vector<1x8x32xf32>
    %253 = vector.shape_cast %177 : vector<8x32xf32> to vector<1x8x32xf32>
    %254 = vector.shape_cast %195 : vector<8x32xf32> to vector<1x8x32xf32>
    %255 = vector.shape_cast %213 : vector<8x32xf32> to vector<1x8x32xf32>
    %256 = vector.shape_cast %231 : vector<8x32xf32> to vector<1x8x32xf32>
    %257 = vector.shape_cast %249 : vector<8x32xf32> to vector<1x8x32xf32>
    %258 = tpu.concatenate %250, %251, %252, %253, %254, %255, %256, %257 in 0 : vector<1x8x32xf32>, vector<1x8x32xf32>, vector<1x8x32xf32>, vector<1x8x32xf32>, vector<1x8x32xf32>, vector<1x8x32xf32>, vector<1x8x32xf32>, vector<1x8x32xf32> -> vector<8x8x32xf32>
    %259 = vector.shape_cast %258 : vector<8x8x32xf32> to vector<64x32xf32>
    %c0_38 = arith.constant 0 : index
    %c0_39 = arith.constant 0 : index
    %c0_40 = arith.constant 0 : index
    %c0_41 = arith.constant 0 : index
    %260 = vector.load %arg2[%c0_38, %c0_39, %c0_40, %c0_41] : memref<2x2x32x128xf32, #tpu.memory_space<vmem>>, vector<1x1x32x128xf32>
    %261 = vector.shape_cast %260 : vector<1x1x32x128xf32> to vector<32x128xf32>
    %c0_42 = arith.constant 0 : index
    %c1_43 = arith.constant 1 : index
    %c0_44 = arith.constant 0 : index
    %c0_45 = arith.constant 0 : index
    %262 = vector.load %arg2[%c0_42, %c1_43, %c0_44, %c0_45] : memref<2x2x32x128xf32, #tpu.memory_space<vmem>>, vector<1x1x32x128xf32>
    %263 = vector.shape_cast %262 : vector<1x1x32x128xf32> to vector<32x128xf32>
    %cst_46 = arith.constant dense<0.000000e+00> : vector<64x128xf32>
    %264 = tpu.matmul %259, %261, %cst_46 {dimension_numbers = #tpu.dot_dimension_numbers<[1], [0], [0], [1], [0, 0, 1, 1], [], []>} : vector<64x32xf32>, vector<32x128xf32>, vector<64x128xf32> -> vector<64x128xf32>
    %265 = vector.shape_cast %264 : vector<64x128xf32> to vector<8x8x128xf32>
    %cst_47 = arith.constant dense<0.000000e+00> : vector<64x128xf32>
    %266 = tpu.matmul %259, %263, %cst_47 {dimension_numbers = #tpu.dot_dimension_numbers<[1], [0], [0], [1], [0, 0, 1, 1], [], []>} : vector<64x32xf32>, vector<32x128xf32>, vector<64x128xf32> -> vector<64x128xf32>
    %267 = vector.shape_cast %266 : vector<64x128xf32> to vector<8x8x128xf32>
    %268 = vector.extract_strided_slice %265 {offsets = [0, 0, 0], sizes = [1, 8, 128], strides = [1, 1, 1]} : vector<8x8x128xf32> to vector<1x8x128xf32>
    %269 = vector.shape_cast %268 : vector<1x8x128xf32> to vector<8x128xf32>
    %270 = vector.extract_strided_slice %267 {offsets = [7, 0, 0], sizes = [1, 8, 128], strides = [1, 1, 1]} : vector<8x8x128xf32> to vector<1x8x128xf32>
    %271 = vector.shape_cast %270 : vector<1x8x128xf32> to vector<8x128xf32>
    %272 = arith.addf %269, %271 : vector<8x128xf32>
    %273 = vector.extract_strided_slice %265 {offsets = [1, 0, 0], sizes = [1, 8, 128], strides = [1, 1, 1]} : vector<8x8x128xf32> to vector<1x8x128xf32>
    %274 = vector.shape_cast %273 : vector<1x8x128xf32> to vector<8x128xf32>
    %275 = vector.extract_strided_slice %267 {offsets = [6, 0, 0], sizes = [1, 8, 128], strides = [1, 1, 1]} : vector<8x8x128xf32> to vector<1x8x128xf32>
    %276 = vector.shape_cast %275 : vector<1x8x128xf32> to vector<8x128xf32>
    %277 = arith.addf %274, %276 : vector<8x128xf32>
    %278 = vector.extract_strided_slice %265 {offsets = [2, 0, 0], sizes = [1, 8, 128], strides = [1, 1, 1]} : vector<8x8x128xf32> to vector<1x8x128xf32>
    %279 = vector.shape_cast %278 : vector<1x8x128xf32> to vector<8x128xf32>
    %280 = vector.extract_strided_slice %267 {offsets = [5, 0, 0], sizes = [1, 8, 128], strides = [1, 1, 1]} : vector<8x8x128xf32> to vector<1x8x128xf32>
    %281 = vector.shape_cast %280 : vector<1x8x128xf32> to vector<8x128xf32>
    %282 = arith.addf %279, %281 : vector<8x128xf32>
    %283 = vector.extract_strided_slice %265 {offsets = [3, 0, 0], sizes = [1, 8, 128], strides = [1, 1, 1]} : vector<8x8x128xf32> to vector<1x8x128xf32>
    %284 = vector.shape_cast %283 : vector<1x8x128xf32> to vector<8x128xf32>
    %285 = vector.extract_strided_slice %267 {offsets = [4, 0, 0], sizes = [1, 8, 128], strides = [1, 1, 1]} : vector<8x8x128xf32> to vector<1x8x128xf32>
    %286 = vector.shape_cast %285 : vector<1x8x128xf32> to vector<8x128xf32>
    %287 = arith.addf %284, %286 : vector<8x128xf32>
    %288 = vector.extract_strided_slice %265 {offsets = [4, 0, 0], sizes = [1, 8, 128], strides = [1, 1, 1]} : vector<8x8x128xf32> to vector<1x8x128xf32>
    %289 = vector.shape_cast %288 : vector<1x8x128xf32> to vector<8x128xf32>
    %290 = vector.extract_strided_slice %267 {offsets = [3, 0, 0], sizes = [1, 8, 128], strides = [1, 1, 1]} : vector<8x8x128xf32> to vector<1x8x128xf32>
    %291 = vector.shape_cast %290 : vector<1x8x128xf32> to vector<8x128xf32>
    %292 = arith.addf %289, %291 : vector<8x128xf32>
    %293 = vector.extract_strided_slice %265 {offsets = [5, 0, 0], sizes = [1, 8, 128], strides = [1, 1, 1]} : vector<8x8x128xf32> to vector<1x8x128xf32>
    %294 = vector.shape_cast %293 : vector<1x8x128xf32> to vector<8x128xf32>
    %295 = vector.extract_strided_slice %267 {offsets = [2, 0, 0], sizes = [1, 8, 128], strides = [1, 1, 1]} : vector<8x8x128xf32> to vector<1x8x128xf32>
    %296 = vector.shape_cast %295 : vector<1x8x128xf32> to vector<8x128xf32>
    %297 = arith.addf %294, %296 : vector<8x128xf32>
    %298 = vector.extract_strided_slice %265 {offsets = [6, 0, 0], sizes = [1, 8, 128], strides = [1, 1, 1]} : vector<8x8x128xf32> to vector<1x8x128xf32>
    %299 = vector.shape_cast %298 : vector<1x8x128xf32> to vector<8x128xf32>
    %300 = vector.extract_strided_slice %267 {offsets = [1, 0, 0], sizes = [1, 8, 128], strides = [1, 1, 1]} : vector<8x8x128xf32> to vector<1x8x128xf32>
    %301 = vector.shape_cast %300 : vector<1x8x128xf32> to vector<8x128xf32>
    %302 = arith.addf %299, %301 : vector<8x128xf32>
    %303 = vector.extract_strided_slice %265 {offsets = [7, 0, 0], sizes = [1, 8, 128], strides = [1, 1, 1]} : vector<8x8x128xf32> to vector<1x8x128xf32>
    %304 = vector.shape_cast %303 : vector<1x8x128xf32> to vector<8x128xf32>
    %305 = vector.extract_strided_slice %267 {offsets = [0, 0, 0], sizes = [1, 8, 128], strides = [1, 1, 1]} : vector<8x8x128xf32> to vector<1x8x128xf32>
    %306 = vector.shape_cast %305 : vector<1x8x128xf32> to vector<8x128xf32>
    %307 = arith.addf %304, %306 : vector<8x128xf32>
    %c1_48 = arith.constant 1 : index
    %c0_49 = arith.constant 0 : index
    %c0_50 = arith.constant 0 : index
    %308 = vector.load %arg3[%c1_48, %c0_49, %c0_50] : memref<3x32x128xf32, #tpu.memory_space<vmem>>, vector<1x32x128xf32>
    %309 = vector.shape_cast %308 : vector<1x32x128xf32> to vector<32x128xf32>
    %c1_51 = arith.constant 1 : index
    %c0_52 = arith.constant 0 : index
    %c0_53 = arith.constant 0 : index
    %310 = vector.load %arg4[%c1_51, %c0_52, %c0_53] : memref<3x1x128xf32, #tpu.memory_space<vmem>>, vector<1x1x128xf32>
    %311 = vector.shape_cast %310 : vector<1x1x128xf32> to vector<1x128xf32>
    %312 = vector.shape_cast %15 : vector<1x128xi1> to vector<1x128xi1>
    %313 = vector.broadcast %312 : vector<1x128xi1> to vector<8x128xi1>
    %314 = arith.select %313, %272, %307 : vector<8x128xi1>, vector<8x128xf32>
    %315 = vector.broadcast %311 : vector<1x128xf32> to vector<8x128xf32>
    %316 = arith.addf %314, %315 : vector<8x128xf32>
    %317 = vector.shape_cast %15 : vector<1x128xi1> to vector<1x128xi1>
    %318 = vector.broadcast %317 : vector<1x128xi1> to vector<8x128xi1>
    %319 = arith.select %318, %277, %302 : vector<8x128xi1>, vector<8x128xf32>
    %320 = vector.broadcast %311 : vector<1x128xf32> to vector<8x128xf32>
    %321 = arith.addf %319, %320 : vector<8x128xf32>
    %322 = vector.shape_cast %15 : vector<1x128xi1> to vector<1x128xi1>
    %323 = vector.broadcast %322 : vector<1x128xi1> to vector<8x128xi1>
    %324 = arith.select %323, %282, %297 : vector<8x128xi1>, vector<8x128xf32>
    %325 = vector.broadcast %311 : vector<1x128xf32> to vector<8x128xf32>
    %326 = arith.addf %324, %325 : vector<8x128xf32>
    %327 = vector.shape_cast %15 : vector<1x128xi1> to vector<1x128xi1>
    %328 = vector.broadcast %327 : vector<1x128xi1> to vector<8x128xi1>
    %329 = arith.select %328, %287, %292 : vector<8x128xi1>, vector<8x128xf32>
    %330 = vector.broadcast %311 : vector<1x128xf32> to vector<8x128xf32>
    %331 = arith.addf %329, %330 : vector<8x128xf32>
    %332 = vector.shape_cast %15 : vector<1x128xi1> to vector<1x128xi1>
    %333 = vector.broadcast %332 : vector<1x128xi1> to vector<8x128xi1>
    %334 = arith.select %333, %292, %287 : vector<8x128xi1>, vector<8x128xf32>
    %335 = vector.broadcast %311 : vector<1x128xf32> to vector<8x128xf32>
    %336 = arith.addf %334, %335 : vector<8x128xf32>
    %337 = vector.shape_cast %15 : vector<1x128xi1> to vector<1x128xi1>
    %338 = vector.broadcast %337 : vector<1x128xi1> to vector<8x128xi1>
    %339 = arith.select %338, %297, %282 : vector<8x128xi1>, vector<8x128xf32>
    %340 = vector.broadcast %311 : vector<1x128xf32> to vector<8x128xf32>
    %341 = arith.addf %339, %340 : vector<8x128xf32>
    %342 = vector.shape_cast %15 : vector<1x128xi1> to vector<1x128xi1>
    %343 = vector.broadcast %342 : vector<1x128xi1> to vector<8x128xi1>
    %344 = arith.select %343, %302, %277 : vector<8x128xi1>, vector<8x128xf32>
    %345 = vector.broadcast %311 : vector<1x128xf32> to vector<8x128xf32>
    %346 = arith.addf %344, %345 : vector<8x128xf32>
    %347 = vector.shape_cast %15 : vector<1x128xi1> to vector<1x128xi1>
    %348 = vector.broadcast %347 : vector<1x128xi1> to vector<8x128xi1>
    %349 = arith.select %348, %307, %272 : vector<8x128xi1>, vector<8x128xf32>
    %350 = vector.broadcast %311 : vector<1x128xf32> to vector<8x128xf32>
    %351 = arith.addf %349, %350 : vector<8x128xf32>
    %cst_54 = arith.constant 0.000000e+00 : f32
    %352 = vector.broadcast %cst_54 : f32 to vector<8x32xf32>
    %cst_55 = arith.constant 0.000000e+00 : f32
    %353 = vector.broadcast %cst_55 : f32 to vector<8x32xf32>
    %cst_56 = arith.constant dense<0.000000e+00> : vector<8x128xf32>
    %354 = tpu.matmul %352, %309, %cst_56 {dimension_numbers = #tpu.dot_dimension_numbers<[1], [0], [0], [1], [0, 0, 1, 1], [], []>} : vector<8x32xf32>, vector<32x128xf32>, vector<8x128xf32> -> vector<8x128xf32>
    %355 = arith.addf %316, %354 : vector<8x128xf32>
    %356 = vector.broadcast %8 : vector<1x128xf32> to vector<8x128xf32>
    %357 = arith.mulf %356, %355 : vector<8x128xf32>
    %358 = math.tanh %357 : vector<8x128xf32>
    %359 = vector.broadcast %8 : vector<1x128xf32> to vector<8x128xf32>
    %360 = arith.mulf %359, %358 : vector<8x128xf32>
    %361 = vector.broadcast %11 : vector<1x128xf32> to vector<8x128xf32>
    %362 = arith.addf %360, %361 : vector<8x128xf32>
    %363 = vector.extract_strided_slice %362 {offsets = [0, 0], sizes = [8, 32], strides = [1, 1]} : vector<8x128xf32> to vector<8x32xf32>
    %364 = vector.extract_strided_slice %362 {offsets = [0, 32], sizes = [8, 32], strides = [1, 1]} : vector<8x128xf32> to vector<8x32xf32>
    %365 = vector.extract_strided_slice %362 {offsets = [0, 64], sizes = [8, 32], strides = [1, 1]} : vector<8x128xf32> to vector<8x32xf32>
    %366 = vector.extract_strided_slice %362 {offsets = [0, 96], sizes = [8, 32], strides = [1, 1]} : vector<8x128xf32> to vector<8x32xf32>
    %367 = arith.mulf %364, %353 : vector<8x32xf32>
    %368 = arith.mulf %363, %365 : vector<8x32xf32>
    %369 = arith.addf %367, %368 : vector<8x32xf32>
    %370 = math.tanh %369 : vector<8x32xf32>
    %371 = arith.mulf %366, %370 : vector<8x32xf32>
    %cst_57 = arith.constant dense<0.000000e+00> : vector<8x128xf32>
    %372 = tpu.matmul %371, %309, %cst_57 {dimension_numbers = #tpu.dot_dimension_numbers<[1], [0], [0], [1], [0, 0, 1, 1], [], []>} : vector<8x32xf32>, vector<32x128xf32>, vector<8x128xf32> -> vector<8x128xf32>
    %373 = arith.addf %321, %372 : vector<8x128xf32>
    %374 = vector.broadcast %8 : vector<1x128xf32> to vector<8x128xf32>
    %375 = arith.mulf %374, %373 : vector<8x128xf32>
    %376 = math.tanh %375 : vector<8x128xf32>
    %377 = vector.broadcast %8 : vector<1x128xf32> to vector<8x128xf32>
    %378 = arith.mulf %377, %376 : vector<8x128xf32>
    %379 = vector.broadcast %11 : vector<1x128xf32> to vector<8x128xf32>
    %380 = arith.addf %378, %379 : vector<8x128xf32>
    %381 = vector.extract_strided_slice %380 {offsets = [0, 0], sizes = [8, 32], strides = [1, 1]} : vector<8x128xf32> to vector<8x32xf32>
    %382 = vector.extract_strided_slice %380 {offsets = [0, 32], sizes = [8, 32], strides = [1, 1]} : vector<8x128xf32> to vector<8x32xf32>
    %383 = vector.extract_strided_slice %380 {offsets = [0, 64], sizes = [8, 32], strides = [1, 1]} : vector<8x128xf32> to vector<8x32xf32>
    %384 = vector.extract_strided_slice %380 {offsets = [0, 96], sizes = [8, 32], strides = [1, 1]} : vector<8x128xf32> to vector<8x32xf32>
    %385 = arith.mulf %382, %369 : vector<8x32xf32>
    %386 = arith.mulf %381, %383 : vector<8x32xf32>
    %387 = arith.addf %385, %386 : vector<8x32xf32>
    %388 = math.tanh %387 : vector<8x32xf32>
    %389 = arith.mulf %384, %388 : vector<8x32xf32>
    %cst_58 = arith.constant dense<0.000000e+00> : vector<8x128xf32>
    %390 = tpu.matmul %389, %309, %cst_58 {dimension_numbers = #tpu.dot_dimension_numbers<[1], [0], [0], [1], [0, 0, 1, 1], [], []>} : vector<8x32xf32>, vector<32x128xf32>, vector<8x128xf32> -> vector<8x128xf32>
    %391 = arith.addf %326, %390 : vector<8x128xf32>
    %392 = vector.broadcast %8 : vector<1x128xf32> to vector<8x128xf32>
    %393 = arith.mulf %392, %391 : vector<8x128xf32>
    %394 = math.tanh %393 : vector<8x128xf32>
    %395 = vector.broadcast %8 : vector<1x128xf32> to vector<8x128xf32>
    %396 = arith.mulf %395, %394 : vector<8x128xf32>
    %397 = vector.broadcast %11 : vector<1x128xf32> to vector<8x128xf32>
    %398 = arith.addf %396, %397 : vector<8x128xf32>
    %399 = vector.extract_strided_slice %398 {offsets = [0, 0], sizes = [8, 32], strides = [1, 1]} : vector<8x128xf32> to vector<8x32xf32>
    %400 = vector.extract_strided_slice %398 {offsets = [0, 32], sizes = [8, 32], strides = [1, 1]} : vector<8x128xf32> to vector<8x32xf32>
    %401 = vector.extract_strided_slice %398 {offsets = [0, 64], sizes = [8, 32], strides = [1, 1]} : vector<8x128xf32> to vector<8x32xf32>
    %402 = vector.extract_strided_slice %398 {offsets = [0, 96], sizes = [8, 32], strides = [1, 1]} : vector<8x128xf32> to vector<8x32xf32>
    %403 = arith.mulf %400, %387 : vector<8x32xf32>
    %404 = arith.mulf %399, %401 : vector<8x32xf32>
    %405 = arith.addf %403, %404 : vector<8x32xf32>
    %406 = math.tanh %405 : vector<8x32xf32>
    %407 = arith.mulf %402, %406 : vector<8x32xf32>
    %cst_59 = arith.constant dense<0.000000e+00> : vector<8x128xf32>
    %408 = tpu.matmul %407, %309, %cst_59 {dimension_numbers = #tpu.dot_dimension_numbers<[1], [0], [0], [1], [0, 0, 1, 1], [], []>} : vector<8x32xf32>, vector<32x128xf32>, vector<8x128xf32> -> vector<8x128xf32>
    %409 = arith.addf %331, %408 : vector<8x128xf32>
    %410 = vector.broadcast %8 : vector<1x128xf32> to vector<8x128xf32>
    %411 = arith.mulf %410, %409 : vector<8x128xf32>
    %412 = math.tanh %411 : vector<8x128xf32>
    %413 = vector.broadcast %8 : vector<1x128xf32> to vector<8x128xf32>
    %414 = arith.mulf %413, %412 : vector<8x128xf32>
    %415 = vector.broadcast %11 : vector<1x128xf32> to vector<8x128xf32>
    %416 = arith.addf %414, %415 : vector<8x128xf32>
    %417 = vector.extract_strided_slice %416 {offsets = [0, 0], sizes = [8, 32], strides = [1, 1]} : vector<8x128xf32> to vector<8x32xf32>
    %418 = vector.extract_strided_slice %416 {offsets = [0, 32], sizes = [8, 32], strides = [1, 1]} : vector<8x128xf32> to vector<8x32xf32>
    %419 = vector.extract_strided_slice %416 {offsets = [0, 64], sizes = [8, 32], strides = [1, 1]} : vector<8x128xf32> to vector<8x32xf32>
    %420 = vector.extract_strided_slice %416 {offsets = [0, 96], sizes = [8, 32], strides = [1, 1]} : vector<8x128xf32> to vector<8x32xf32>
    %421 = arith.mulf %418, %405 : vector<8x32xf32>
    %422 = arith.mulf %417, %419 : vector<8x32xf32>
    %423 = arith.addf %421, %422 : vector<8x32xf32>
    %424 = math.tanh %423 : vector<8x32xf32>
    %425 = arith.mulf %420, %424 : vector<8x32xf32>
    %cst_60 = arith.constant dense<0.000000e+00> : vector<8x128xf32>
    %426 = tpu.matmul %425, %309, %cst_60 {dimension_numbers = #tpu.dot_dimension_numbers<[1], [0], [0], [1], [0, 0, 1, 1], [], []>} : vector<8x32xf32>, vector<32x128xf32>, vector<8x128xf32> -> vector<8x128xf32>
    %427 = arith.addf %336, %426 : vector<8x128xf32>
    %428 = vector.broadcast %8 : vector<1x128xf32> to vector<8x128xf32>
    %429 = arith.mulf %428, %427 : vector<8x128xf32>
    %430 = math.tanh %429 : vector<8x128xf32>
    %431 = vector.broadcast %8 : vector<1x128xf32> to vector<8x128xf32>
    %432 = arith.mulf %431, %430 : vector<8x128xf32>
    %433 = vector.broadcast %11 : vector<1x128xf32> to vector<8x128xf32>
    %434 = arith.addf %432, %433 : vector<8x128xf32>
    %435 = vector.extract_strided_slice %434 {offsets = [0, 0], sizes = [8, 32], strides = [1, 1]} : vector<8x128xf32> to vector<8x32xf32>
    %436 = vector.extract_strided_slice %434 {offsets = [0, 32], sizes = [8, 32], strides = [1, 1]} : vector<8x128xf32> to vector<8x32xf32>
    %437 = vector.extract_strided_slice %434 {offsets = [0, 64], sizes = [8, 32], strides = [1, 1]} : vector<8x128xf32> to vector<8x32xf32>
    %438 = vector.extract_strided_slice %434 {offsets = [0, 96], sizes = [8, 32], strides = [1, 1]} : vector<8x128xf32> to vector<8x32xf32>
    %439 = arith.mulf %436, %423 : vector<8x32xf32>
    %440 = arith.mulf %435, %437 : vector<8x32xf32>
    %441 = arith.addf %439, %440 : vector<8x32xf32>
    %442 = math.tanh %441 : vector<8x32xf32>
    %443 = arith.mulf %438, %442 : vector<8x32xf32>
    %cst_61 = arith.constant dense<0.000000e+00> : vector<8x128xf32>
    %444 = tpu.matmul %443, %309, %cst_61 {dimension_numbers = #tpu.dot_dimension_numbers<[1], [0], [0], [1], [0, 0, 1, 1], [], []>} : vector<8x32xf32>, vector<32x128xf32>, vector<8x128xf32> -> vector<8x128xf32>
    %445 = arith.addf %341, %444 : vector<8x128xf32>
    %446 = vector.broadcast %8 : vector<1x128xf32> to vector<8x128xf32>
    %447 = arith.mulf %446, %445 : vector<8x128xf32>
    %448 = math.tanh %447 : vector<8x128xf32>
    %449 = vector.broadcast %8 : vector<1x128xf32> to vector<8x128xf32>
    %450 = arith.mulf %449, %448 : vector<8x128xf32>
    %451 = vector.broadcast %11 : vector<1x128xf32> to vector<8x128xf32>
    %452 = arith.addf %450, %451 : vector<8x128xf32>
    %453 = vector.extract_strided_slice %452 {offsets = [0, 0], sizes = [8, 32], strides = [1, 1]} : vector<8x128xf32> to vector<8x32xf32>
    %454 = vector.extract_strided_slice %452 {offsets = [0, 32], sizes = [8, 32], strides = [1, 1]} : vector<8x128xf32> to vector<8x32xf32>
    %455 = vector.extract_strided_slice %452 {offsets = [0, 64], sizes = [8, 32], strides = [1, 1]} : vector<8x128xf32> to vector<8x32xf32>
    %456 = vector.extract_strided_slice %452 {offsets = [0, 96], sizes = [8, 32], strides = [1, 1]} : vector<8x128xf32> to vector<8x32xf32>
    %457 = arith.mulf %454, %441 : vector<8x32xf32>
    %458 = arith.mulf %453, %455 : vector<8x32xf32>
    %459 = arith.addf %457, %458 : vector<8x32xf32>
    %460 = math.tanh %459 : vector<8x32xf32>
    %461 = arith.mulf %456, %460 : vector<8x32xf32>
    %cst_62 = arith.constant dense<0.000000e+00> : vector<8x128xf32>
    %462 = tpu.matmul %461, %309, %cst_62 {dimension_numbers = #tpu.dot_dimension_numbers<[1], [0], [0], [1], [0, 0, 1, 1], [], []>} : vector<8x32xf32>, vector<32x128xf32>, vector<8x128xf32> -> vector<8x128xf32>
    %463 = arith.addf %346, %462 : vector<8x128xf32>
    %464 = vector.broadcast %8 : vector<1x128xf32> to vector<8x128xf32>
    %465 = arith.mulf %464, %463 : vector<8x128xf32>
    %466 = math.tanh %465 : vector<8x128xf32>
    %467 = vector.broadcast %8 : vector<1x128xf32> to vector<8x128xf32>
    %468 = arith.mulf %467, %466 : vector<8x128xf32>
    %469 = vector.broadcast %11 : vector<1x128xf32> to vector<8x128xf32>
    %470 = arith.addf %468, %469 : vector<8x128xf32>
    %471 = vector.extract_strided_slice %470 {offsets = [0, 0], sizes = [8, 32], strides = [1, 1]} : vector<8x128xf32> to vector<8x32xf32>
    %472 = vector.extract_strided_slice %470 {offsets = [0, 32], sizes = [8, 32], strides = [1, 1]} : vector<8x128xf32> to vector<8x32xf32>
    %473 = vector.extract_strided_slice %470 {offsets = [0, 64], sizes = [8, 32], strides = [1, 1]} : vector<8x128xf32> to vector<8x32xf32>
    %474 = vector.extract_strided_slice %470 {offsets = [0, 96], sizes = [8, 32], strides = [1, 1]} : vector<8x128xf32> to vector<8x32xf32>
    %475 = arith.mulf %472, %459 : vector<8x32xf32>
    %476 = arith.mulf %471, %473 : vector<8x32xf32>
    %477 = arith.addf %475, %476 : vector<8x32xf32>
    %478 = math.tanh %477 : vector<8x32xf32>
    %479 = arith.mulf %474, %478 : vector<8x32xf32>
    %cst_63 = arith.constant dense<0.000000e+00> : vector<8x128xf32>
    %480 = tpu.matmul %479, %309, %cst_63 {dimension_numbers = #tpu.dot_dimension_numbers<[1], [0], [0], [1], [0, 0, 1, 1], [], []>} : vector<8x32xf32>, vector<32x128xf32>, vector<8x128xf32> -> vector<8x128xf32>
    %481 = arith.addf %351, %480 : vector<8x128xf32>
    %482 = vector.broadcast %8 : vector<1x128xf32> to vector<8x128xf32>
    %483 = arith.mulf %482, %481 : vector<8x128xf32>
    %484 = math.tanh %483 : vector<8x128xf32>
    %485 = vector.broadcast %8 : vector<1x128xf32> to vector<8x128xf32>
    %486 = arith.mulf %485, %484 : vector<8x128xf32>
    %487 = vector.broadcast %11 : vector<1x128xf32> to vector<8x128xf32>
    %488 = arith.addf %486, %487 : vector<8x128xf32>
    %489 = vector.extract_strided_slice %488 {offsets = [0, 0], sizes = [8, 32], strides = [1, 1]} : vector<8x128xf32> to vector<8x32xf32>
    %490 = vector.extract_strided_slice %488 {offsets = [0, 32], sizes = [8, 32], strides = [1, 1]} : vector<8x128xf32> to vector<8x32xf32>
    %491 = vector.extract_strided_slice %488 {offsets = [0, 64], sizes = [8, 32], strides = [1, 1]} : vector<8x128xf32> to vector<8x32xf32>
    %492 = vector.extract_strided_slice %488 {offsets = [0, 96], sizes = [8, 32], strides = [1, 1]} : vector<8x128xf32> to vector<8x32xf32>
    %493 = arith.mulf %490, %477 : vector<8x32xf32>
    %494 = arith.mulf %489, %491 : vector<8x32xf32>
    %495 = arith.addf %493, %494 : vector<8x32xf32>
    %496 = math.tanh %495 : vector<8x32xf32>
    %497 = arith.mulf %492, %496 : vector<8x32xf32>
    %498 = vector.shape_cast %371 : vector<8x32xf32> to vector<1x8x32xf32>
    %499 = vector.shape_cast %389 : vector<8x32xf32> to vector<1x8x32xf32>
    %500 = vector.shape_cast %407 : vector<8x32xf32> to vector<1x8x32xf32>
    %501 = vector.shape_cast %425 : vector<8x32xf32> to vector<1x8x32xf32>
    %502 = vector.shape_cast %443 : vector<8x32xf32> to vector<1x8x32xf32>
    %503 = vector.shape_cast %461 : vector<8x32xf32> to vector<1x8x32xf32>
    %504 = vector.shape_cast %479 : vector<8x32xf32> to vector<1x8x32xf32>
    %505 = vector.shape_cast %497 : vector<8x32xf32> to vector<1x8x32xf32>
    %506 = tpu.concatenate %498, %499, %500, %501, %502, %503, %504, %505 in 0 : vector<1x8x32xf32>, vector<1x8x32xf32>, vector<1x8x32xf32>, vector<1x8x32xf32>, vector<1x8x32xf32>, vector<1x8x32xf32>, vector<1x8x32xf32>, vector<1x8x32xf32> -> vector<8x8x32xf32>
    %507 = vector.shape_cast %506 : vector<8x8x32xf32> to vector<64x32xf32>
    %c1_64 = arith.constant 1 : index
    %c0_65 = arith.constant 0 : index
    %c0_66 = arith.constant 0 : index
    %c0_67 = arith.constant 0 : index
    %508 = vector.load %arg2[%c1_64, %c0_65, %c0_66, %c0_67] : memref<2x2x32x128xf32, #tpu.memory_space<vmem>>, vector<1x1x32x128xf32>
    %509 = vector.shape_cast %508 : vector<1x1x32x128xf32> to vector<32x128xf32>
    %c1_68 = arith.constant 1 : index
    %c1_69 = arith.constant 1 : index
    %c0_70 = arith.constant 0 : index
    %c0_71 = arith.constant 0 : index
    %510 = vector.load %arg2[%c1_68, %c1_69, %c0_70, %c0_71] : memref<2x2x32x128xf32, #tpu.memory_space<vmem>>, vector<1x1x32x128xf32>
    %511 = vector.shape_cast %510 : vector<1x1x32x128xf32> to vector<32x128xf32>
    %cst_72 = arith.constant dense<0.000000e+00> : vector<64x128xf32>
    %512 = tpu.matmul %507, %509, %cst_72 {dimension_numbers = #tpu.dot_dimension_numbers<[1], [0], [0], [1], [0, 0, 1, 1], [], []>} : vector<64x32xf32>, vector<32x128xf32>, vector<64x128xf32> -> vector<64x128xf32>
    %513 = vector.shape_cast %512 : vector<64x128xf32> to vector<8x8x128xf32>
    %cst_73 = arith.constant dense<0.000000e+00> : vector<64x128xf32>
    %514 = tpu.matmul %507, %511, %cst_73 {dimension_numbers = #tpu.dot_dimension_numbers<[1], [0], [0], [1], [0, 0, 1, 1], [], []>} : vector<64x32xf32>, vector<32x128xf32>, vector<64x128xf32> -> vector<64x128xf32>
    %515 = vector.shape_cast %514 : vector<64x128xf32> to vector<8x8x128xf32>
    %516 = vector.extract_strided_slice %513 {offsets = [0, 0, 0], sizes = [1, 8, 128], strides = [1, 1, 1]} : vector<8x8x128xf32> to vector<1x8x128xf32>
    %517 = vector.shape_cast %516 : vector<1x8x128xf32> to vector<8x128xf32>
    %518 = vector.extract_strided_slice %515 {offsets = [7, 0, 0], sizes = [1, 8, 128], strides = [1, 1, 1]} : vector<8x8x128xf32> to vector<1x8x128xf32>
    %519 = vector.shape_cast %518 : vector<1x8x128xf32> to vector<8x128xf32>
    %520 = arith.addf %517, %519 : vector<8x128xf32>
    %521 = vector.extract_strided_slice %513 {offsets = [1, 0, 0], sizes = [1, 8, 128], strides = [1, 1, 1]} : vector<8x8x128xf32> to vector<1x8x128xf32>
    %522 = vector.shape_cast %521 : vector<1x8x128xf32> to vector<8x128xf32>
    %523 = vector.extract_strided_slice %515 {offsets = [6, 0, 0], sizes = [1, 8, 128], strides = [1, 1, 1]} : vector<8x8x128xf32> to vector<1x8x128xf32>
    %524 = vector.shape_cast %523 : vector<1x8x128xf32> to vector<8x128xf32>
    %525 = arith.addf %522, %524 : vector<8x128xf32>
    %526 = vector.extract_strided_slice %513 {offsets = [2, 0, 0], sizes = [1, 8, 128], strides = [1, 1, 1]} : vector<8x8x128xf32> to vector<1x8x128xf32>
    %527 = vector.shape_cast %526 : vector<1x8x128xf32> to vector<8x128xf32>
    %528 = vector.extract_strided_slice %515 {offsets = [5, 0, 0], sizes = [1, 8, 128], strides = [1, 1, 1]} : vector<8x8x128xf32> to vector<1x8x128xf32>
    %529 = vector.shape_cast %528 : vector<1x8x128xf32> to vector<8x128xf32>
    %530 = arith.addf %527, %529 : vector<8x128xf32>
    %531 = vector.extract_strided_slice %513 {offsets = [3, 0, 0], sizes = [1, 8, 128], strides = [1, 1, 1]} : vector<8x8x128xf32> to vector<1x8x128xf32>
    %532 = vector.shape_cast %531 : vector<1x8x128xf32> to vector<8x128xf32>
    %533 = vector.extract_strided_slice %515 {offsets = [4, 0, 0], sizes = [1, 8, 128], strides = [1, 1, 1]} : vector<8x8x128xf32> to vector<1x8x128xf32>
    %534 = vector.shape_cast %533 : vector<1x8x128xf32> to vector<8x128xf32>
    %535 = arith.addf %532, %534 : vector<8x128xf32>
    %536 = vector.extract_strided_slice %513 {offsets = [4, 0, 0], sizes = [1, 8, 128], strides = [1, 1, 1]} : vector<8x8x128xf32> to vector<1x8x128xf32>
    %537 = vector.shape_cast %536 : vector<1x8x128xf32> to vector<8x128xf32>
    %538 = vector.extract_strided_slice %515 {offsets = [3, 0, 0], sizes = [1, 8, 128], strides = [1, 1, 1]} : vector<8x8x128xf32> to vector<1x8x128xf32>
    %539 = vector.shape_cast %538 : vector<1x8x128xf32> to vector<8x128xf32>
    %540 = arith.addf %537, %539 : vector<8x128xf32>
    %541 = vector.extract_strided_slice %513 {offsets = [5, 0, 0], sizes = [1, 8, 128], strides = [1, 1, 1]} : vector<8x8x128xf32> to vector<1x8x128xf32>
    %542 = vector.shape_cast %541 : vector<1x8x128xf32> to vector<8x128xf32>
    %543 = vector.extract_strided_slice %515 {offsets = [2, 0, 0], sizes = [1, 8, 128], strides = [1, 1, 1]} : vector<8x8x128xf32> to vector<1x8x128xf32>
    %544 = vector.shape_cast %543 : vector<1x8x128xf32> to vector<8x128xf32>
    %545 = arith.addf %542, %544 : vector<8x128xf32>
    %546 = vector.extract_strided_slice %513 {offsets = [6, 0, 0], sizes = [1, 8, 128], strides = [1, 1, 1]} : vector<8x8x128xf32> to vector<1x8x128xf32>
    %547 = vector.shape_cast %546 : vector<1x8x128xf32> to vector<8x128xf32>
    %548 = vector.extract_strided_slice %515 {offsets = [1, 0, 0], sizes = [1, 8, 128], strides = [1, 1, 1]} : vector<8x8x128xf32> to vector<1x8x128xf32>
    %549 = vector.shape_cast %548 : vector<1x8x128xf32> to vector<8x128xf32>
    %550 = arith.addf %547, %549 : vector<8x128xf32>
    %551 = vector.extract_strided_slice %513 {offsets = [7, 0, 0], sizes = [1, 8, 128], strides = [1, 1, 1]} : vector<8x8x128xf32> to vector<1x8x128xf32>
    %552 = vector.shape_cast %551 : vector<1x8x128xf32> to vector<8x128xf32>
    %553 = vector.extract_strided_slice %515 {offsets = [0, 0, 0], sizes = [1, 8, 128], strides = [1, 1, 1]} : vector<8x8x128xf32> to vector<1x8x128xf32>
    %554 = vector.shape_cast %553 : vector<1x8x128xf32> to vector<8x128xf32>
    %555 = arith.addf %552, %554 : vector<8x128xf32>
    %c2_74 = arith.constant 2 : index
    %c0_75 = arith.constant 0 : index
    %c0_76 = arith.constant 0 : index
    %556 = vector.load %arg3[%c2_74, %c0_75, %c0_76] : memref<3x32x128xf32, #tpu.memory_space<vmem>>, vector<1x32x128xf32>
    %557 = vector.shape_cast %556 : vector<1x32x128xf32> to vector<32x128xf32>
    %c2_77 = arith.constant 2 : index
    %c0_78 = arith.constant 0 : index
    %c0_79 = arith.constant 0 : index
    %558 = vector.load %arg4[%c2_77, %c0_78, %c0_79] : memref<3x1x128xf32, #tpu.memory_space<vmem>>, vector<1x1x128xf32>
    %559 = vector.shape_cast %558 : vector<1x1x128xf32> to vector<1x128xf32>
    %560 = vector.shape_cast %15 : vector<1x128xi1> to vector<1x128xi1>
    %561 = vector.broadcast %560 : vector<1x128xi1> to vector<8x128xi1>
    %562 = arith.select %561, %520, %555 : vector<8x128xi1>, vector<8x128xf32>
    %563 = vector.broadcast %559 : vector<1x128xf32> to vector<8x128xf32>
    %564 = arith.addf %562, %563 : vector<8x128xf32>
    %565 = vector.shape_cast %15 : vector<1x128xi1> to vector<1x128xi1>
    %566 = vector.broadcast %565 : vector<1x128xi1> to vector<8x128xi1>
    %567 = arith.select %566, %525, %550 : vector<8x128xi1>, vector<8x128xf32>
    %568 = vector.broadcast %559 : vector<1x128xf32> to vector<8x128xf32>
    %569 = arith.addf %567, %568 : vector<8x128xf32>
    %570 = vector.shape_cast %15 : vector<1x128xi1> to vector<1x128xi1>
    %571 = vector.broadcast %570 : vector<1x128xi1> to vector<8x128xi1>
    %572 = arith.select %571, %530, %545 : vector<8x128xi1>, vector<8x128xf32>
    %573 = vector.broadcast %559 : vector<1x128xf32> to vector<8x128xf32>
    %574 = arith.addf %572, %573 : vector<8x128xf32>
    %575 = vector.shape_cast %15 : vector<1x128xi1> to vector<1x128xi1>
    %576 = vector.broadcast %575 : vector<1x128xi1> to vector<8x128xi1>
    %577 = arith.select %576, %535, %540 : vector<8x128xi1>, vector<8x128xf32>
    %578 = vector.broadcast %559 : vector<1x128xf32> to vector<8x128xf32>
    %579 = arith.addf %577, %578 : vector<8x128xf32>
    %580 = vector.shape_cast %15 : vector<1x128xi1> to vector<1x128xi1>
    %581 = vector.broadcast %580 : vector<1x128xi1> to vector<8x128xi1>
    %582 = arith.select %581, %540, %535 : vector<8x128xi1>, vector<8x128xf32>
    %583 = vector.broadcast %559 : vector<1x128xf32> to vector<8x128xf32>
    %584 = arith.addf %582, %583 : vector<8x128xf32>
    %585 = vector.shape_cast %15 : vector<1x128xi1> to vector<1x128xi1>
    %586 = vector.broadcast %585 : vector<1x128xi1> to vector<8x128xi1>
    %587 = arith.select %586, %545, %530 : vector<8x128xi1>, vector<8x128xf32>
    %588 = vector.broadcast %559 : vector<1x128xf32> to vector<8x128xf32>
    %589 = arith.addf %587, %588 : vector<8x128xf32>
    %590 = vector.shape_cast %15 : vector<1x128xi1> to vector<1x128xi1>
    %591 = vector.broadcast %590 : vector<1x128xi1> to vector<8x128xi1>
    %592 = arith.select %591, %550, %525 : vector<8x128xi1>, vector<8x128xf32>
    %593 = vector.broadcast %559 : vector<1x128xf32> to vector<8x128xf32>
    %594 = arith.addf %592, %593 : vector<8x128xf32>
    %595 = vector.shape_cast %15 : vector<1x128xi1> to vector<1x128xi1>
    %596 = vector.broadcast %595 : vector<1x128xi1> to vector<8x128xi1>
    %597 = arith.select %596, %555, %520 : vector<8x128xi1>, vector<8x128xf32>
    %598 = vector.broadcast %559 : vector<1x128xf32> to vector<8x128xf32>
    %599 = arith.addf %597, %598 : vector<8x128xf32>
    %cst_80 = arith.constant 0.000000e+00 : f32
    %600 = vector.broadcast %cst_80 : f32 to vector<8x32xf32>
    %cst_81 = arith.constant 0.000000e+00 : f32
    %601 = vector.broadcast %cst_81 : f32 to vector<8x32xf32>
    %cst_82 = arith.constant dense<0.000000e+00> : vector<8x128xf32>
    %602 = tpu.matmul %600, %557, %cst_82 {dimension_numbers = #tpu.dot_dimension_numbers<[1], [0], [0], [1], [0, 0, 1, 1], [], []>} : vector<8x32xf32>, vector<32x128xf32>, vector<8x128xf32> -> vector<8x128xf32>
    %603 = arith.addf %564, %602 : vector<8x128xf32>
    %604 = vector.broadcast %8 : vector<1x128xf32> to vector<8x128xf32>
    %605 = arith.mulf %604, %603 : vector<8x128xf32>
    %606 = math.tanh %605 : vector<8x128xf32>
    %607 = vector.broadcast %8 : vector<1x128xf32> to vector<8x128xf32>
    %608 = arith.mulf %607, %606 : vector<8x128xf32>
    %609 = vector.broadcast %11 : vector<1x128xf32> to vector<8x128xf32>
    %610 = arith.addf %608, %609 : vector<8x128xf32>
    %611 = vector.extract_strided_slice %610 {offsets = [0, 0], sizes = [8, 32], strides = [1, 1]} : vector<8x128xf32> to vector<8x32xf32>
    %612 = vector.extract_strided_slice %610 {offsets = [0, 32], sizes = [8, 32], strides = [1, 1]} : vector<8x128xf32> to vector<8x32xf32>
    %613 = vector.extract_strided_slice %610 {offsets = [0, 64], sizes = [8, 32], strides = [1, 1]} : vector<8x128xf32> to vector<8x32xf32>
    %614 = vector.extract_strided_slice %610 {offsets = [0, 96], sizes = [8, 32], strides = [1, 1]} : vector<8x128xf32> to vector<8x32xf32>
    %615 = arith.mulf %612, %601 : vector<8x32xf32>
    %616 = arith.mulf %611, %613 : vector<8x32xf32>
    %617 = arith.addf %615, %616 : vector<8x32xf32>
    %618 = math.tanh %617 : vector<8x32xf32>
    %619 = arith.mulf %614, %618 : vector<8x32xf32>
    %cst_83 = arith.constant dense<0.000000e+00> : vector<8x128xf32>
    %620 = tpu.matmul %619, %557, %cst_83 {dimension_numbers = #tpu.dot_dimension_numbers<[1], [0], [0], [1], [0, 0, 1, 1], [], []>} : vector<8x32xf32>, vector<32x128xf32>, vector<8x128xf32> -> vector<8x128xf32>
    %621 = arith.addf %569, %620 : vector<8x128xf32>
    %622 = vector.broadcast %8 : vector<1x128xf32> to vector<8x128xf32>
    %623 = arith.mulf %622, %621 : vector<8x128xf32>
    %624 = math.tanh %623 : vector<8x128xf32>
    %625 = vector.broadcast %8 : vector<1x128xf32> to vector<8x128xf32>
    %626 = arith.mulf %625, %624 : vector<8x128xf32>
    %627 = vector.broadcast %11 : vector<1x128xf32> to vector<8x128xf32>
    %628 = arith.addf %626, %627 : vector<8x128xf32>
    %629 = vector.extract_strided_slice %628 {offsets = [0, 0], sizes = [8, 32], strides = [1, 1]} : vector<8x128xf32> to vector<8x32xf32>
    %630 = vector.extract_strided_slice %628 {offsets = [0, 32], sizes = [8, 32], strides = [1, 1]} : vector<8x128xf32> to vector<8x32xf32>
    %631 = vector.extract_strided_slice %628 {offsets = [0, 64], sizes = [8, 32], strides = [1, 1]} : vector<8x128xf32> to vector<8x32xf32>
    %632 = vector.extract_strided_slice %628 {offsets = [0, 96], sizes = [8, 32], strides = [1, 1]} : vector<8x128xf32> to vector<8x32xf32>
    %633 = arith.mulf %630, %617 : vector<8x32xf32>
    %634 = arith.mulf %629, %631 : vector<8x32xf32>
    %635 = arith.addf %633, %634 : vector<8x32xf32>
    %636 = math.tanh %635 : vector<8x32xf32>
    %637 = arith.mulf %632, %636 : vector<8x32xf32>
    %cst_84 = arith.constant dense<0.000000e+00> : vector<8x128xf32>
    %638 = tpu.matmul %637, %557, %cst_84 {dimension_numbers = #tpu.dot_dimension_numbers<[1], [0], [0], [1], [0, 0, 1, 1], [], []>} : vector<8x32xf32>, vector<32x128xf32>, vector<8x128xf32> -> vector<8x128xf32>
    %639 = arith.addf %574, %638 : vector<8x128xf32>
    %640 = vector.broadcast %8 : vector<1x128xf32> to vector<8x128xf32>
    %641 = arith.mulf %640, %639 : vector<8x128xf32>
    %642 = math.tanh %641 : vector<8x128xf32>
    %643 = vector.broadcast %8 : vector<1x128xf32> to vector<8x128xf32>
    %644 = arith.mulf %643, %642 : vector<8x128xf32>
    %645 = vector.broadcast %11 : vector<1x128xf32> to vector<8x128xf32>
    %646 = arith.addf %644, %645 : vector<8x128xf32>
    %647 = vector.extract_strided_slice %646 {offsets = [0, 0], sizes = [8, 32], strides = [1, 1]} : vector<8x128xf32> to vector<8x32xf32>
    %648 = vector.extract_strided_slice %646 {offsets = [0, 32], sizes = [8, 32], strides = [1, 1]} : vector<8x128xf32> to vector<8x32xf32>
    %649 = vector.extract_strided_slice %646 {offsets = [0, 64], sizes = [8, 32], strides = [1, 1]} : vector<8x128xf32> to vector<8x32xf32>
    %650 = vector.extract_strided_slice %646 {offsets = [0, 96], sizes = [8, 32], strides = [1, 1]} : vector<8x128xf32> to vector<8x32xf32>
    %651 = arith.mulf %648, %635 : vector<8x32xf32>
    %652 = arith.mulf %647, %649 : vector<8x32xf32>
    %653 = arith.addf %651, %652 : vector<8x32xf32>
    %654 = math.tanh %653 : vector<8x32xf32>
    %655 = arith.mulf %650, %654 : vector<8x32xf32>
    %cst_85 = arith.constant dense<0.000000e+00> : vector<8x128xf32>
    %656 = tpu.matmul %655, %557, %cst_85 {dimension_numbers = #tpu.dot_dimension_numbers<[1], [0], [0], [1], [0, 0, 1, 1], [], []>} : vector<8x32xf32>, vector<32x128xf32>, vector<8x128xf32> -> vector<8x128xf32>
    %657 = arith.addf %579, %656 : vector<8x128xf32>
    %658 = vector.broadcast %8 : vector<1x128xf32> to vector<8x128xf32>
    %659 = arith.mulf %658, %657 : vector<8x128xf32>
    %660 = math.tanh %659 : vector<8x128xf32>
    %661 = vector.broadcast %8 : vector<1x128xf32> to vector<8x128xf32>
    %662 = arith.mulf %661, %660 : vector<8x128xf32>
    %663 = vector.broadcast %11 : vector<1x128xf32> to vector<8x128xf32>
    %664 = arith.addf %662, %663 : vector<8x128xf32>
    %665 = vector.extract_strided_slice %664 {offsets = [0, 0], sizes = [8, 32], strides = [1, 1]} : vector<8x128xf32> to vector<8x32xf32>
    %666 = vector.extract_strided_slice %664 {offsets = [0, 32], sizes = [8, 32], strides = [1, 1]} : vector<8x128xf32> to vector<8x32xf32>
    %667 = vector.extract_strided_slice %664 {offsets = [0, 64], sizes = [8, 32], strides = [1, 1]} : vector<8x128xf32> to vector<8x32xf32>
    %668 = vector.extract_strided_slice %664 {offsets = [0, 96], sizes = [8, 32], strides = [1, 1]} : vector<8x128xf32> to vector<8x32xf32>
    %669 = arith.mulf %666, %653 : vector<8x32xf32>
    %670 = arith.mulf %665, %667 : vector<8x32xf32>
    %671 = arith.addf %669, %670 : vector<8x32xf32>
    %672 = math.tanh %671 : vector<8x32xf32>
    %673 = arith.mulf %668, %672 : vector<8x32xf32>
    %cst_86 = arith.constant dense<0.000000e+00> : vector<8x128xf32>
    %674 = tpu.matmul %673, %557, %cst_86 {dimension_numbers = #tpu.dot_dimension_numbers<[1], [0], [0], [1], [0, 0, 1, 1], [], []>} : vector<8x32xf32>, vector<32x128xf32>, vector<8x128xf32> -> vector<8x128xf32>
    %675 = arith.addf %584, %674 : vector<8x128xf32>
    %676 = vector.broadcast %8 : vector<1x128xf32> to vector<8x128xf32>
    %677 = arith.mulf %676, %675 : vector<8x128xf32>
    %678 = math.tanh %677 : vector<8x128xf32>
    %679 = vector.broadcast %8 : vector<1x128xf32> to vector<8x128xf32>
    %680 = arith.mulf %679, %678 : vector<8x128xf32>
    %681 = vector.broadcast %11 : vector<1x128xf32> to vector<8x128xf32>
    %682 = arith.addf %680, %681 : vector<8x128xf32>
    %683 = vector.extract_strided_slice %682 {offsets = [0, 0], sizes = [8, 32], strides = [1, 1]} : vector<8x128xf32> to vector<8x32xf32>
    %684 = vector.extract_strided_slice %682 {offsets = [0, 32], sizes = [8, 32], strides = [1, 1]} : vector<8x128xf32> to vector<8x32xf32>
    %685 = vector.extract_strided_slice %682 {offsets = [0, 64], sizes = [8, 32], strides = [1, 1]} : vector<8x128xf32> to vector<8x32xf32>
    %686 = vector.extract_strided_slice %682 {offsets = [0, 96], sizes = [8, 32], strides = [1, 1]} : vector<8x128xf32> to vector<8x32xf32>
    %687 = arith.mulf %684, %671 : vector<8x32xf32>
    %688 = arith.mulf %683, %685 : vector<8x32xf32>
    %689 = arith.addf %687, %688 : vector<8x32xf32>
    %690 = math.tanh %689 : vector<8x32xf32>
    %691 = arith.mulf %686, %690 : vector<8x32xf32>
    %cst_87 = arith.constant dense<0.000000e+00> : vector<8x128xf32>
    %692 = tpu.matmul %691, %557, %cst_87 {dimension_numbers = #tpu.dot_dimension_numbers<[1], [0], [0], [1], [0, 0, 1, 1], [], []>} : vector<8x32xf32>, vector<32x128xf32>, vector<8x128xf32> -> vector<8x128xf32>
    %693 = arith.addf %589, %692 : vector<8x128xf32>
    %694 = vector.broadcast %8 : vector<1x128xf32> to vector<8x128xf32>
    %695 = arith.mulf %694, %693 : vector<8x128xf32>
    %696 = math.tanh %695 : vector<8x128xf32>
    %697 = vector.broadcast %8 : vector<1x128xf32> to vector<8x128xf32>
    %698 = arith.mulf %697, %696 : vector<8x128xf32>
    %699 = vector.broadcast %11 : vector<1x128xf32> to vector<8x128xf32>
    %700 = arith.addf %698, %699 : vector<8x128xf32>
    %701 = vector.extract_strided_slice %700 {offsets = [0, 0], sizes = [8, 32], strides = [1, 1]} : vector<8x128xf32> to vector<8x32xf32>
    %702 = vector.extract_strided_slice %700 {offsets = [0, 32], sizes = [8, 32], strides = [1, 1]} : vector<8x128xf32> to vector<8x32xf32>
    %703 = vector.extract_strided_slice %700 {offsets = [0, 64], sizes = [8, 32], strides = [1, 1]} : vector<8x128xf32> to vector<8x32xf32>
    %704 = vector.extract_strided_slice %700 {offsets = [0, 96], sizes = [8, 32], strides = [1, 1]} : vector<8x128xf32> to vector<8x32xf32>
    %705 = arith.mulf %702, %689 : vector<8x32xf32>
    %706 = arith.mulf %701, %703 : vector<8x32xf32>
    %707 = arith.addf %705, %706 : vector<8x32xf32>
    %708 = math.tanh %707 : vector<8x32xf32>
    %709 = arith.mulf %704, %708 : vector<8x32xf32>
    %cst_88 = arith.constant dense<0.000000e+00> : vector<8x128xf32>
    %710 = tpu.matmul %709, %557, %cst_88 {dimension_numbers = #tpu.dot_dimension_numbers<[1], [0], [0], [1], [0, 0, 1, 1], [], []>} : vector<8x32xf32>, vector<32x128xf32>, vector<8x128xf32> -> vector<8x128xf32>
    %711 = arith.addf %594, %710 : vector<8x128xf32>
    %712 = vector.broadcast %8 : vector<1x128xf32> to vector<8x128xf32>
    %713 = arith.mulf %712, %711 : vector<8x128xf32>
    %714 = math.tanh %713 : vector<8x128xf32>
    %715 = vector.broadcast %8 : vector<1x128xf32> to vector<8x128xf32>
    %716 = arith.mulf %715, %714 : vector<8x128xf32>
    %717 = vector.broadcast %11 : vector<1x128xf32> to vector<8x128xf32>
    %718 = arith.addf %716, %717 : vector<8x128xf32>
    %719 = vector.extract_strided_slice %718 {offsets = [0, 0], sizes = [8, 32], strides = [1, 1]} : vector<8x128xf32> to vector<8x32xf32>
    %720 = vector.extract_strided_slice %718 {offsets = [0, 32], sizes = [8, 32], strides = [1, 1]} : vector<8x128xf32> to vector<8x32xf32>
    %721 = vector.extract_strided_slice %718 {offsets = [0, 64], sizes = [8, 32], strides = [1, 1]} : vector<8x128xf32> to vector<8x32xf32>
    %722 = vector.extract_strided_slice %718 {offsets = [0, 96], sizes = [8, 32], strides = [1, 1]} : vector<8x128xf32> to vector<8x32xf32>
    %723 = arith.mulf %720, %707 : vector<8x32xf32>
    %724 = arith.mulf %719, %721 : vector<8x32xf32>
    %725 = arith.addf %723, %724 : vector<8x32xf32>
    %726 = math.tanh %725 : vector<8x32xf32>
    %727 = arith.mulf %722, %726 : vector<8x32xf32>
    %cst_89 = arith.constant dense<0.000000e+00> : vector<8x128xf32>
    %728 = tpu.matmul %727, %557, %cst_89 {dimension_numbers = #tpu.dot_dimension_numbers<[1], [0], [0], [1], [0, 0, 1, 1], [], []>} : vector<8x32xf32>, vector<32x128xf32>, vector<8x128xf32> -> vector<8x128xf32>
    %729 = arith.addf %599, %728 : vector<8x128xf32>
    %730 = vector.broadcast %8 : vector<1x128xf32> to vector<8x128xf32>
    %731 = arith.mulf %730, %729 : vector<8x128xf32>
    %732 = math.tanh %731 : vector<8x128xf32>
    %733 = vector.broadcast %8 : vector<1x128xf32> to vector<8x128xf32>
    %734 = arith.mulf %733, %732 : vector<8x128xf32>
    %735 = vector.broadcast %11 : vector<1x128xf32> to vector<8x128xf32>
    %736 = arith.addf %734, %735 : vector<8x128xf32>
    %737 = vector.extract_strided_slice %736 {offsets = [0, 0], sizes = [8, 32], strides = [1, 1]} : vector<8x128xf32> to vector<8x32xf32>
    %738 = vector.extract_strided_slice %736 {offsets = [0, 32], sizes = [8, 32], strides = [1, 1]} : vector<8x128xf32> to vector<8x32xf32>
    %739 = vector.extract_strided_slice %736 {offsets = [0, 64], sizes = [8, 32], strides = [1, 1]} : vector<8x128xf32> to vector<8x32xf32>
    %740 = vector.extract_strided_slice %736 {offsets = [0, 96], sizes = [8, 32], strides = [1, 1]} : vector<8x128xf32> to vector<8x32xf32>
    %741 = arith.mulf %738, %725 : vector<8x32xf32>
    %742 = arith.mulf %737, %739 : vector<8x32xf32>
    %743 = arith.addf %741, %742 : vector<8x32xf32>
    %744 = math.tanh %743 : vector<8x32xf32>
    %745 = arith.mulf %740, %744 : vector<8x32xf32>
    %746 = vector.shape_cast %18 : vector<1x32xi1> to vector<1x32xi1>
    %747 = vector.broadcast %746 : vector<1x32xi1> to vector<8x32xi1>
    %748 = arith.select %747, %745, %619 : vector<8x32xi1>, vector<8x32xf32>
    %c0_90 = arith.constant 0 : index
    %c0_91 = arith.constant 0 : index
    %749 = vector.load %arg5[%c0_90, %c0_91] : memref<32x4xf32, #tpu.memory_space<vmem>>, vector<32x4xf32>
    %cst_92 = arith.constant dense<0.000000e+00> : vector<8x4xf32>
    %750 = tpu.matmul %748, %749, %cst_92 {dimension_numbers = #tpu.dot_dimension_numbers<[1], [0], [0], [1], [0, 0, 1, 1], [], []>} : vector<8x32xf32>, vector<32x4xf32>, vector<8x4xf32> -> vector<8x4xf32>
    %c0_93 = arith.constant 0 : index
    %c0_94 = arith.constant 0 : index
    %751 = vector.load %arg6[%c0_93, %c0_94] : memref<1x4xf32, #tpu.memory_space<vmem>>, vector<1x4xf32>
    %752 = vector.broadcast %751 : vector<1x4xf32> to vector<8x4xf32>
    %753 = arith.addf %750, %752 : vector<8x4xf32>
    %c0_95 = arith.constant 0 : index
    %c0_96 = arith.constant 0 : index
    %754 = vector.load %arg7[%c0_95, %c0_96] : memref<8x4xf32, #tpu.memory_space<vmem>>, vector<8x4xf32>
    tpu.vector_store %arg7[%c0_95, %c0_96], %753 {strides = array<i32>} : memref<8x4xf32, #tpu.memory_space<vmem>>, vector<8x4xf32>,
    return
  }
}

</mosaic_0001>

<llo_original>
// kernel: lstm_predictor_forward.1
$region0: #{lstm_predictor_forward.1}
  #allocation0 [shape = 'u32[]', space=smem, size = 0x4, offset = 0x4, fixed_abs, tag = 'smem constant byte address 0x4 - core index']
  #allocation1 [shape = 'u32[72,128]{1,0:T(1,128)}', space=vmem, size = 0x9000, scoped, tag = 'internal scratch']
  %s0 = inlined_call_operand.vmem [shape: f32[8,8,1], index: 0, kind: input, shape index: {}]
  %s1 = inlined_call_operand.vmem [shape: f32[1,128], index: 1, kind: input, shape index: {}]
  %s2 = inlined_call_operand.hbm [shape: f32[2,2,32,128], index: 2, kind: input, shape index: {}]
  %s3 = inlined_call_operand.vmem [shape: f32[3,32,128], index: 3, kind: input, shape index: {}]
  %s4 = inlined_call_operand.vmem [shape: f32[3,1,128], index: 4, kind: input, shape index: {}]
  %s5 = inlined_call_operand.vmem [shape: f32[32,4], index: 5, kind: input, shape index: {}]
  %s6 = inlined_call_operand.vmem [shape: f32[1,4], index: 6, kind: input, shape index: {}]
  %s7 = inlined_call_operand.vmem [shape: f32[8,4], index: 7, kind: output, shape index: {}]
  %s8 = sld [smem:[#allocation0]]
  $region42: #{lstm_predictor_forward.1} parent=0
    _
  %s10 = ssub.s32 1, %s8
  %s11 = scalar_select 0, %s10, %s8
  $region1: #{lstm_predictor_forward.1} parent=0
    #allocation2 [shape = 'u8[65536]{0}', space=vmem, size = 0x10000, scoped, tag = 'input window, operand 2, single buffered']
    #allocation3 [shape = 's32[1]{0}', space=sflag, size = 0x4, scoped, tag = 'scoped memory for lstm_predictor_forward.1']
    %12 = vsyncpa [#allocation3], 0
    // Predicated region
    $region2: #{lstm_predictor_forward.1} parent=1 // pred_check
      _
    $region3: #{lstm_predictor_forward.1} parent=1 // pred_check_branch
      %14 = sbr.rel (0) target = $region5
    $region4: #{lstm_predictor_forward.1} parent=1 // pred_region
      _
    $region5: #{lstm_predictor_forward.1} parent=1 // pred_fallthru
      _
    // Predicated region
    $region6: #{lstm_predictor_forward.1} parent=1 // pred_check
      _
    $region7: #{lstm_predictor_forward.1} parent=1 // pred_check_branch
      %16 = sbr.rel (0) target = $region9
    $region8: #{lstm_predictor_forward.1} parent=1 // pred_region
      _
    $region9: #{lstm_predictor_forward.1} parent=1 // pred_fallthru
      _
    // Predicated region
    $region10: #{lstm_predictor_forward.1} parent=1 // pred_check
      _
    $region11: #{lstm_predictor_forward.1} parent=1 // pred_check_branch
      %18 = sbr.rel (0) target = $region13
    $region12: #{lstm_predictor_forward.1} parent=1 // pred_region
      %20 = vsyncadd [#allocation3], 0
      %s21 = sshll.u32 %s2, 4
      %s22 = int_to_ptr.hbm [resolvable:$true] %s21
      %s23 = sshll.u32 [#allocation2], 4
      %s24 = int_to_ptr.vmem [resolvable:$true] %s23
      %29 = dma.hbm_to_vmem [thread:$0]  %s22, 2048, %s24, [#allocation3], 128, 128, 8
    $region13: #{lstm_predictor_forward.1} parent=1 // pred_fallthru
      _
    // Predicated region
    $region14: #{lstm_predictor_forward.1} parent=1 // pred_check
      _
    $region15: #{lstm_predictor_forward.1} parent=1 // pred_check_branch
      %31 = sbr.rel (0) target = $region17
    $region16: #{lstm_predictor_forward.1} parent=1 // pred_region
      _
    $region17: #{lstm_predictor_forward.1} parent=1 // pred_fallthru
      _
    // Predicated region
    $region18: #{lstm_predictor_forward.1} parent=1 // pred_check
      _
    $region19: #{lstm_predictor_forward.1} parent=1 // pred_check_branch
      %33 = sbr.rel (0) target = $region21
    $region20: #{lstm_predictor_forward.1} parent=1 // pred_region
      _
    $region21: #{lstm_predictor_forward.1} parent=1 // pred_fallthru
      _
    // Predicated region
    $region22: #{lstm_predictor_forward.1} parent=1 // pred_check
      _
    $region23: #{lstm_predictor_forward.1} parent=1 // pred_check_branch
      %35 = sbr.rel (0) target = $region25
    $region24: #{lstm_predictor_forward.1} parent=1 // pred_region
      _
    $region25: #{lstm_predictor_forward.1} parent=1 // pred_fallthru
      _
    // Predicated region
    $region26: #{lstm_predictor_forward.1} parent=1 // pred_check
      _
    $region27: #{lstm_predictor_forward.1} parent=1 // pred_check_branch
      %37 = sbr.rel (0) target = $region29
    $region28: #{lstm_predictor_forward.1} parent=1 // pred_region
      _
    $region29: #{lstm_predictor_forward.1} parent=1 // pred_fallthru
      _
    // Predicated region
    $region30: #{lstm_predictor_forward.1} parent=1 // pred_check
      _
    $region31: #{lstm_predictor_forward.1} parent=1 // pred_check_branch
      %39 = sbr.rel (0) target = $region33
    $region32: #{lstm_predictor_forward.1} parent=1 // pred_region
      %41 = dma.done [#allocation3], 2048
    $region33: #{lstm_predictor_forward.1} parent=1 // pred_fallthru
      _
    %v42 = vlaneseq
    %v43 = vand.u32 %v42, 127
    %vm44 = vcmp.ge.s32.totalorder %v43, 64
    %vm45 = vcmp.lt.s32.totalorder %v43, 96
    %vm46 = vmand %vm44, %vm45
    %v47 = vsel %vm46, 1.0, 0.5
    %v48 = vsel %vm46, 0.0, 0.5
    %v49 = vand.u32 %v43, 31
    %vm50 = vcmp.lt.s32.totalorder %v49, 16
    %vm51 = vcmp.lt.s32.totalorder %v43, 16
    %v52 = vld [vmem:[%s1] sm:$0x1]
    %v53 = vld [vmem:[%s0] sm:$0xff]
    %55 = vset.pattern.permute.xlu0 0
    %56 = vperm.xlu0 %55, %v53
    %v57 = vpop.permute.xlu0 %56
    %v60 = vperm.slane %v52, 0
    %v62 = vmul.f32 %v57, %v60
    %s63 = scalar_lea.vmem %s0, 8
    %v64 = vld [vmem:[%s63] sm:$0xff]
    %66 = vset.pattern.permute.xlu0 0
    %67 = vperm.xlu0 %66, %v64
    %v68 = vpop.permute.xlu0 %67
    %v70 = vmul.f32 %v68, %v60
    %s71 = scalar_lea.vmem %s0, 16
    %v72 = vld [vmem:[%s71] sm:$0xff]
    %74 = vset.pattern.permute.xlu0 0
    %75 = vperm.xlu0 %74, %v72
    %v76 = vpop.permute.xlu0 %75
    %v78 = vmul.f32 %v76, %v60
    %s79 = scalar_lea.vmem %s0, 24
    %v80 = vld [vmem:[%s79] sm:$0xff]
    %82 = vset.pattern.permute.xlu0 0
    %83 = vperm.xlu0 %82, %v80
    %v84 = vpop.permute.xlu0 %83
    %v86 = vmul.f32 %v84, %v60
    %s87 = scalar_lea.vmem %s0, 32
    %v88 = vld [vmem:[%s87] sm:$0xff]
    %90 = vset.pattern.permute.xlu0 0
    %91 = vperm.xlu0 %90, %v88
    %v92 = vpop.permute.xlu0 %91
    %v94 = vmul.f32 %v92, %v60
    %s95 = scalar_lea.vmem %s0, 40
    %v96 = vld [vmem:[%s95] sm:$0xff]
    %98 = vset.pattern.permute.xlu0 0
    %99 = vperm.xlu0 %98, %v96
    %v100 = vpop.permute.xlu0 %99
    %v102 = vmul.f32 %v100, %v60
    %s103 = scalar_lea.vmem %s0, 48
    %v104 = vld [vmem:[%s103] sm:$0xff]
    %106 = vset.pattern.permute.xlu0 0
    %107 = vperm.xlu0 %106, %v104
    %v108 = vpop.permute.xlu0 %107
    %v110 = vmul.f32 %v108, %v60
    %s111 = scalar_lea.vmem %s0, 56
    %v112 = vld [vmem:[%s111] sm:$0xff]
    %114 = vset.pattern.permute.xlu0 0
    %115 = vperm.xlu0 %114, %v112
    %v116 = vpop.permute.xlu0 %115
    %v118 = vmul.f32 %v116, %v60
    %v119 = vld [vmem:[%s3] sm:$0xff]
    %v120 = vld [vmem:[%s3 + $0x8] sm:$0xff]
    %v121 = vld [vmem:[%s3 + $0x10] sm:$0xff]
    %v122 = vld [vmem:[%s3 + $0x18] sm:$0xff]
    %v123 = vld [vmem:[%s4] sm:$0x1]
    %v124 = vsel %vm50, 1, 0
    %vm125 = vcmp.eq.s32.totalorder %v124, 1
    %v126 = vsel %vm125, %v62, %v118
    %v128 = vperm.slane %v123, 0
    %v130 = vadd.f32 %v126, %v128
    %v131 = vsel %vm125, %v70, %v110
    %v132 = vadd.f32 %v131, %v128
    %v133 = vsel %vm125, %v78, %v102
    %v134 = vadd.f32 %v133, %v128
    %v135 = vsel %vm125, %v86, %v94
    %v136 = vadd.f32 %v135, %v128
    %v137 = vsel %vm125, %v94, %v86
    %v138 = vadd.f32 %v137, %v128
    %v139 = vsel %vm125, %v102, %v78
    %v140 = vadd.f32 %v139, %v128
    %v141 = vsel %vm125, %v110, %v70
    %v142 = vadd.f32 %v141, %v128
    %v143 = vsel %vm125, %v118, %v62
    %v144 = vadd.f32 %v143, %v128
    %vm145 = vcmask 261120
    %v147 = vsel %vm145, 0.0, 0
    %149 = vmatpush.msra.mxu0 0.0
    %150 = vmatpush.msra.mxu0 0.0
    %151 = vmatpush.msra.mxu0 0.0
    %152 = vmatpush.msra.mxu0 0.0
    %153 = vmatpush.msra.mxu0 0.0
    %154 = vmatpush.msra.mxu0 0.0
    %155 = vmatpush.msra.mxu0 0.0
    %156 = vmatpush.msra.mxu0 0.0
    %157 = vmatpush.msra.mxu0 0.0
    %158 = vmatpush.msra.mxu0 0.0
    %159 = vmatpush.msra.mxu0 0.0
    %160 = vmatpush.msra.mxu0 0.0
    %161 = vmatpush.msra.mxu0 %v122
    %162 = vmatpush.msra.mxu0 %v121
    %163 = vmatpush.msra.mxu0 %v120
    %164 = vmatpush.msra.mxu0 %v119
    %165 = vmatmul.f32.gmra.mxu0 %v147
    %v166 = vpop.f32.mrf.mxu0
    %v167 = vadd.f32 0.0, %v166
    %168 = vdwg.mxu0
    %v169 = vadd.f32 %v130, %v167
    %v170 = vmul.f32 %v47, %v169
    %v171 = vtanh.pop %v170
    %v172 = vmul.f32 %v47, %v171
    %v173 = vadd.f32 %v172, %v48
    %v174 = vmul.f32 %v173, 0.0
    %176 = vrot.lane.b32.xlu0 %v173, 64
    %v177 = vpop.permute.xlu0 %176
    %v179 = vmul.f32 %v173, %v177
    %181 = vrot.lane.b32.xlu0 %v179, 32
    %v182 = vpop.permute.xlu0 %181
    %v184 = vadd.f32 %v174, %v182
    %v185 = vtanh.pop %v184
    %187 = vrot.lane.b32.xlu0 %v185, 64
    %v188 = vpop.permute.xlu0 %187
    %v190 = vmul.f32 %v173, %v188
    %192 = vrot.lane.b32.xlu0 %v190, 32
    %v193 = vpop.permute.xlu0 %192
    %v194 = vsel %vm145, %v193, 0
    %196 = vmatpush.msra.mxu0 0.0
    %197 = vmatpush.msra.mxu0 0.0
    %198 = vmatpush.msra.mxu0 0.0
    %199 = vmatpush.msra.mxu0 0.0
    %200 = vmatpush.msra.mxu0 0.0
    %201 = vmatpush.msra.mxu0 0.0
    %202 = vmatpush.msra.mxu0 0.0
    %203 = vmatpush.msra.mxu0 0.0
    %204 = vmatpush.msra.mxu0 0.0
    %205 = vmatpush.msra.mxu0 0.0
    %206 = vmatpush.msra.mxu0 0.0
    %207 = vmatpush.msra.mxu0 0.0
    %208 = vmatpush.msra.mxu0 %v122
    %209 = vmatpush.msra.mxu0 %v121
    %210 = vmatpush.msra.mxu0 %v120
    %211 = vmatpush.msra.mxu0 %v119
    %212 = vmatmul.f32.gmra.mxu0 %v194
    %v213 = vpop.f32.mrf.mxu0
    %v214 = vadd.f32 0.0, %v213
    %215 = vdwg.mxu0
    %v216 = vadd.f32 %v132, %v214
    %v217 = vmul.f32 %v47, %v216
    %v218 = vtanh.pop %v217
    %v219 = vmul.f32 %v47, %v218
    %v220 = vadd.f32 %v219, %v48
    %v221 = vmul.f32 %v220, %v184
    %223 = vrot.lane.b32.xlu0 %v220, 64
    %v224 = vpop.permute.xlu0 %223
    %v226 = vmul.f32 %v220, %v224
    %228 = vrot.lane.b32.xlu0 %v226, 32
    %v229 = vpop.permute.xlu0 %228
    %v231 = vadd.f32 %v221, %v229
    %v232 = vtanh.pop %v231
    %234 = vrot.lane.b32.xlu0 %v232, 64
    %v235 = vpop.permute.xlu0 %234
    %v237 = vmul.f32 %v220, %v235
    %239 = vrot.lane.b32.xlu0 %v237, 32
    %v240 = vpop.permute.xlu0 %239
    %v241 = vsel %vm145, %v240, 0
    %243 = vmatpush.msra.mxu0 0.0
    %244 = vmatpush.msra.mxu0 0.0
    %245 = vmatpush.msra.mxu0 0.0
    %246 = vmatpush.msra.mxu0 0.0
    %247 = vmatpush.msra.mxu0 0.0
    %248 = vmatpush.msra.mxu0 0.0
    %249 = vmatpush.msra.mxu0 0.0
    %250 = vmatpush.msra.mxu0 0.0
    %251 = vmatpush.msra.mxu0 0.0
    %252 = vmatpush.msra.mxu0 0.0
    %253 = vmatpush.msra.mxu0 0.0
    %254 = vmatpush.msra.mxu0 0.0
    %255 = vmatpush.msra.mxu0 %v122
    %256 = vmatpush.msra.mxu0 %v121
    %257 = vmatpush.msra.mxu0 %v120
    %258 = vmatpush.msra.mxu0 %v119
    %259 = vmatmul.f32.gmra.mxu0 %v241
    %v260 = vpop.f32.mrf.mxu0
    %v261 = vadd.f32 0.0, %v260
    %262 = vdwg.mxu0
    %v263 = vadd.f32 %v134, %v261
    %v264 = vmul.f32 %v47, %v263
    %v265 = vtanh.pop %v264
    %v266 = vmul.f32 %v47, %v265
    %v267 = vadd.f32 %v266, %v48
    %v268 = vmul.f32 %v267, %v231
    %270 = vrot.lane.b32.xlu0 %v267, 64
    %v271 = vpop.permute.xlu0 %270
    %v273 = vmul.f32 %v267, %v271
    %275 = vrot.lane.b32.xlu0 %v273, 32
    %v276 = vpop.permute.xlu0 %275
    %v278 = vadd.f32 %v268, %v276
    %v279 = vtanh.pop %v278
    %281 = vrot.lane.b32.xlu0 %v279, 64
    %v282 = vpop.permute.xlu0 %281
    %v284 = vmul.f32 %v267, %v282
    %286 = vrot.lane.b32.xlu0 %v284, 32
    %v287 = vpop.permute.xlu0 %286
    %v288 = vsel %vm145, %v287, 0
    %290 = vmatpush.msra.mxu0 0.0
    %291 = vmatpush.msra.mxu0 0.0
    %292 = vmatpush.msra.mxu0 0.0
    %293 = vmatpush.msra.mxu0 0.0
    %294 = vmatpush.msra.mxu0 0.0
    %295 = vmatpush.msra.mxu0 0.0
    %296 = vmatpush.msra.mxu0 0.0
    %297 = vmatpush.msra.mxu0 0.0
    %298 = vmatpush.msra.mxu0 0.0
    %299 = vmatpush.msra.mxu0 0.0
    %300 = vmatpush.msra.mxu0 0.0
    %301 = vmatpush.msra.mxu0 0.0
    %302 = vmatpush.msra.mxu0 %v122
    %303 = vmatpush.msra.mxu0 %v121
    %304 = vmatpush.msra.mxu0 %v120
    %305 = vmatpush.msra.mxu0 %v119
    %306 = vmatmul.f32.gmra.mxu0 %v288
    %v307 = vpop.f32.mrf.mxu0
    %v308 = vadd.f32 0.0, %v307
    %309 = vdwg.mxu0
    %v310 = vadd.f32 %v136, %v308
    %v311 = vmul.f32 %v47, %v310
    %v312 = vtanh.pop %v311
    %v313 = vmul.f32 %v47, %v312
    %v314 = vadd.f32 %v313, %v48
    %v315 = vmul.f32 %v314, %v278
    %317 = vrot.lane.b32.xlu0 %v314, 64
    %v318 = vpop.permute.xlu0 %317
    %v320 = vmul.f32 %v314, %v318
    %322 = vrot.lane.b32.xlu0 %v320, 32
    %v323 = vpop.permute.xlu0 %322
    %v325 = vadd.f32 %v315, %v323
    %v326 = vtanh.pop %v325
    %328 = vrot.lane.b32.xlu0 %v326, 64
    %v329 = vpop.permute.xlu0 %328
    %v331 = vmul.f32 %v314, %v329
    %333 = vrot.lane.b32.xlu0 %v331, 32
    %v334 = vpop.permute.xlu0 %333
    %v335 = vsel %vm145, %v334, 0
    %337 = vmatpush.msra.mxu0 0.0
    %338 = vmatpush.msra.mxu0 0.0
    %339 = vmatpush.msra.mxu0 0.0
    %340 = vmatpush.msra.mxu0 0.0
    %341 = vmatpush.msra.mxu0 0.0
    %342 = vmatpush.msra.mxu0 0.0
    %343 = vmatpush.msra.mxu0 0.0
    %344 = vmatpush.msra.mxu0 0.0
    %345 = vmatpush.msra.mxu0 0.0
    %346 = vmatpush.msra.mxu0 0.0
    %347 = vmatpush.msra.mxu0 0.0
    %348 = vmatpush.msra.mxu0 0.0
    %349 = vmatpush.msra.mxu0 %v122
    %350 = vmatpush.msra.mxu0 %v121
    %351 = vmatpush.msra.mxu0 %v120
    %352 = vmatpush.msra.mxu0 %v119
    %353 = vmatmul.f32.gmra.mxu0 %v335
    %v354 = vpop.f32.mrf.mxu0
    %v355 = vadd.f32 0.0, %v354
    %356 = vdwg.mxu0
    %v357 = vadd.f32 %v138, %v355
    %v358 = vmul.f32 %v47, %v357
    %v359 = vtanh.pop %v358
    %v360 = vmul.f32 %v47, %v359
    %v361 = vadd.f32 %v360, %v48
    %v362 = vmul.f32 %v361, %v325
    %364 = vrot.lane.b32.xlu0 %v361, 64
    %v365 = vpop.permute.xlu0 %364
    %v367 = vmul.f32 %v361, %v365
    %369 = vrot.lane.b32.xlu0 %v367, 32
    %v370 = vpop.permute.xlu0 %369
    %v372 = vadd.f32 %v362, %v370
    %v373 = vtanh.pop %v372
    %375 = vrot.lane.b32.xlu0 %v373, 64
    %v376 = vpop.permute.xlu0 %375
    %v378 = vmul.f32 %v361, %v376
    %380 = vrot.lane.b32.xlu0 %v378, 32
    %v381 = vpop.permute.xlu0 %380
    %v382 = vsel %vm145, %v381, 0
    %384 = vmatpush.msra.mxu0 0.0
    %385 = vmatpush.msra.mxu0 0.0
    %386 = vmatpush.msra.mxu0 0.0
    %387 = vmatpush.msra.mxu0 0.0
    %388 = vmatpush.msra.mxu0 0.0
    %389 = vmatpush.msra.mxu0 0.0
    %390 = vmatpush.msra.mxu0 0.0
    %391 = vmatpush.msra.mxu0 0.0
    %392 = vmatpush.msra.mxu0 0.0
    %393 = vmatpush.msra.mxu0 0.0
    %394 = vmatpush.msra.mxu0 0.0
    %395 = vmatpush.msra.mxu0 0.0
    %396 = vmatpush.msra.mxu0 %v122
    %397 = vmatpush.msra.mxu0 %v121
    %398 = vmatpush.msra.mxu0 %v120
    %399 = vmatpush.msra.mxu0 %v119
    %400 = vmatmul.f32.gmra.mxu0 %v382
    %v401 = vpop.f32.mrf.mxu0
    %v402 = vadd.f32 0.0, %v401
    %403 = vdwg.mxu0
    %v404 = vadd.f32 %v140, %v402
    %v405 = vmul.f32 %v47, %v404
    %v406 = vtanh.pop %v405
    %v407 = vmul.f32 %v47, %v406
    %v408 = vadd.f32 %v407, %v48
    %v409 = vmul.f32 %v408, %v372
    %411 = vrot.lane.b32.xlu0 %v408, 64
    %v412 = vpop.permute.xlu0 %411
    %v414 = vmul.f32 %v408, %v412
    %416 = vrot.lane.b32.xlu0 %v414, 32
    %v417 = vpop.permute.xlu0 %416
    %v419 = vadd.f32 %v409, %v417
    %v420 = vtanh.pop %v419
    %422 = vrot.lane.b32.xlu0 %v420, 64
    %v423 = vpop.permute.xlu0 %422
    %v425 = vmul.f32 %v408, %v423
    %427 = vrot.lane.b32.xlu0 %v425, 32
    %v428 = vpop.permute.xlu0 %427
    %v429 = vsel %vm145, %v428, 0
    %431 = vmatpush.msra.mxu0 0.0
    %432 = vmatpush.msra.mxu0 0.0
    %433 = vmatpush.msra.mxu0 0.0
    %434 = vmatpush.msra.mxu0 0.0
    %435 = vmatpush.msra.mxu0 0.0
    %436 = vmatpush.msra.mxu0 0.0
    %437 = vmatpush.msra.mxu0 0.0
    %438 = vmatpush.msra.mxu0 0.0
    %439 = vmatpush.msra.mxu0 0.0
    %440 = vmatpush.msra.mxu0 0.0
    %441 = vmatpush.msra.mxu0 0.0
    %442 = vmatpush.msra.mxu0 0.0
    %443 = vmatpush.msra.mxu0 %v122
    %444 = vmatpush.msra.mxu0 %v121
    %445 = vmatpush.msra.mxu0 %v120
    %446 = vmatpush.msra.mxu0 %v119
    %447 = vmatmul.f32.gmra.mxu0 %v429
    %v448 = vpop.f32.mrf.mxu0
    %v449 = vadd.f32 0.0, %v448
    %450 = vdwg.mxu0
    %v451 = vadd.f32 %v142, %v449
    %v452 = vmul.f32 %v47, %v451
    %v453 = vtanh.pop %v452
    %v454 = vmul.f32 %v47, %v453
    %v455 = vadd.f32 %v454, %v48
    %v456 = vmul.f32 %v455, %v419
    %458 = vrot.lane.b32.xlu0 %v455, 64
    %v459 = vpop.permute.xlu0 %458
    %v461 = vmul.f32 %v455, %v459
    %463 = vrot.lane.b32.xlu0 %v461, 32
    %v464 = vpop.permute.xlu0 %463
    %v466 = vadd.f32 %v456, %v464
    %v467 = vtanh.pop %v466
    %469 = vrot.lane.b32.xlu0 %v467, 64
    %v470 = vpop.permute.xlu0 %469
    %v472 = vmul.f32 %v455, %v470
    %474 = vrot.lane.b32.xlu0 %v472, 32
    %v475 = vpop.permute.xlu0 %474
    %v476 = vsel %vm145, %v475, 0
    %478 = vmatpush.msra.mxu0 0.0
    %479 = vmatpush.msra.mxu0 0.0
    %480 = vmatpush.msra.mxu0 0.0
    %481 = vmatpush.msra.mxu0 0.0
    %482 = vmatpush.msra.mxu0 0.0
    %483 = vmatpush.msra.mxu0 0.0
    %484 = vmatpush.msra.mxu0 0.0
    %485 = vmatpush.msra.mxu0 0.0
    %486 = vmatpush.msra.mxu0 0.0
    %487 = vmatpush.msra.mxu0 0.0
    %488 = vmatpush.msra.mxu0 0.0
    %489 = vmatpush.msra.mxu0 0.0
    %490 = vmatpush.msra.mxu0 %v122
    %491 = vmatpush.msra.mxu0 %v121
    %492 = vmatpush.msra.mxu0 %v120
    %493 = vmatpush.msra.mxu0 %v119
    %494 = vmatmul.f32.gmra.mxu0 %v476
    %v495 = vpop.f32.mrf.mxu0
    %v496 = vadd.f32 0.0, %v495
    %497 = vdwg.mxu0
    %v498 = vadd.f32 %v144, %v496
    %v499 = vmul.f32 %v47, %v498
    %v500 = vtanh.pop %v499
    %v501 = vmul.f32 %v47, %v500
    %v502 = vadd.f32 %v501, %v48
    %v503 = vmul.f32 %v502, %v466
    %505 = vrot.lane.b32.xlu0 %v502, 64
    %v506 = vpop.permute.xlu0 %505
    %v508 = vmul.f32 %v502, %v506
    %510 = vrot.lane.b32.xlu0 %v508, 32
    %v511 = vpop.permute.xlu0 %510
    %v513 = vadd.f32 %v503, %v511
    %v514 = vtanh.pop %v513
    %516 = vrot.lane.b32.xlu0 %v514, 64
    %v517 = vpop.permute.xlu0 %516
    %v519 = vmul.f32 %v502, %v517
    %v520 = vld [vmem:[#allocation2] sm:$0xff]
    %v521 = vld [vmem:[#allocation2 + $0x8] sm:$0xff]
    %v522 = vld [vmem:[#allocation2 + $0x10] sm:$0xff]
    %v523 = vld [vmem:[#allocation2 + $0x18] sm:$0xff]
    %s524 = scalar_lea.vmem [#allocation2], 32
    %v525 = vld [vmem:[%s524] sm:$0xff]
    %v526 = vld [vmem:[%s524 + $0x8] sm:$0xff]
    %v527 = vld [vmem:[%s524 + $0x10] sm:$0xff]
    %v528 = vld [vmem:[%s524 + $0x18] sm:$0xff]
    %530 = vrot.lane.b32.xlu0 %v519, 32
    %v531 = vpop.permute.xlu0 %530
    %v532 = vsel %vm145, %v531, 0
    %534 = vmatpush.msra.mxu0 0.0
    %535 = vmatpush.msra.mxu0 0.0
    %536 = vmatpush.msra.mxu0 0.0
    %537 = vmatpush.msra.mxu0 0.0
    %538 = vmatpush.msra.mxu0 0.0
    %539 = vmatpush.msra.mxu0 0.0
    %540 = vmatpush.msra.mxu0 0.0
    %541 = vmatpush.msra.mxu0 0.0
    %542 = vmatpush.msra.mxu0 0.0
    %543 = vmatpush.msra.mxu0 0.0
    %544 = vmatpush.msra.mxu0 0.0
    %545 = vmatpush.msra.mxu0 0.0
    %546 = vmatpush.msra.mxu0 %v523
    %547 = vmatpush.msra.mxu0 %v522
    %548 = vmatpush.msra.mxu0 %v521
    %549 = vmatpush.msra.mxu0 %v520
    %550 = vmatmul.f32.gmra.mxu0 %v194
    %v551 = vpop.f32.mrf.mxu0
    %v552 = vadd.f32 0.0, %v551
    %553 = vmatmul.f32.gmra.mxu0 %v241
    %v554 = vpop.f32.mrf.mxu0
    %v555 = vadd.f32 0.0, %v554
    %556 = vmatmul.f32.gmra.mxu0 %v288
    %v557 = vpop.f32.mrf.mxu0
    %v558 = vadd.f32 0.0, %v557
    %559 = vmatmul.f32.gmra.mxu0 %v335
    %v560 = vpop.f32.mrf.mxu0
    %v561 = vadd.f32 0.0, %v560
    %562 = vmatmul.f32.gmra.mxu0 %v382
    %v563 = vpop.f32.mrf.mxu0
    %v564 = vadd.f32 0.0, %v563
    %565 = vmatmul.f32.gmra.mxu0 %v429
    %v566 = vpop.f32.mrf.mxu0
    %v567 = vadd.f32 0.0, %v566
    %568 = vmatmul.f32.gmra.mxu0 %v476
    %v569 = vpop.f32.mrf.mxu0
    %v570 = vadd.f32 0.0, %v569
    %571 = vmatmul.f32.gmra.mxu0 %v532
    %v572 = vpop.f32.mrf.mxu0
    %v573 = vadd.f32 0.0, %v572
    %574 = vdwg.mxu0
    %575 = vmatpush.msra.mxu0 0.0
    %576 = vmatpush.msra.mxu0 0.0
    %577 = vmatpush.msra.mxu0 0.0
    %578 = vmatpush.msra.mxu0 0.0
    %579 = vmatpush.msra.mxu0 0.0
    %580 = vmatpush.msra.mxu0 0.0
    %581 = vmatpush.msra.mxu0 0.0
    %582 = vmatpush.msra.mxu0 0.0
    %583 = vmatpush.msra.mxu0 0.0
    %584 = vmatpush.msra.mxu0 0.0
    %585 = vmatpush.msra.mxu0 0.0
    %586 = vmatpush.msra.mxu0 0.0
    %587 = vmatpush.msra.mxu0 %v528
    %588 = vmatpush.msra.mxu0 %v527
    %589 = vmatpush.msra.mxu0 %v526
    %590 = vmatpush.msra.mxu0 %v525
    %591 = vmatmul.f32.gmra.mxu0 %v194
    %v592 = vpop.f32.mrf.mxu0
    %v593 = vadd.f32 0.0, %v592
    %594 = vmatmul.f32.gmra.mxu0 %v241
    %v595 = vpop.f32.mrf.mxu0
    %v596 = vadd.f32 0.0, %v595
    %597 = vmatmul.f32.gmra.mxu0 %v288
    %v598 = vpop.f32.mrf.mxu0
    %v599 = vadd.f32 0.0, %v598
    %600 = vmatmul.f32.gmra.mxu0 %v335
    %v601 = vpop.f32.mrf.mxu0
    %v602 = vadd.f32 0.0, %v601
    %603 = vmatmul.f32.gmra.mxu0 %v382
    %v604 = vpop.f32.mrf.mxu0
    %v605 = vadd.f32 0.0, %v604
    %606 = vmatmul.f32.gmra.mxu0 %v429
    %v607 = vpop.f32.mrf.mxu0
    %v608 = vadd.f32 0.0, %v607
    %609 = vmatmul.f32.gmra.mxu0 %v476
    %v610 = vpop.f32.mrf.mxu0
    %v611 = vadd.f32 0.0, %v610
    %612 = vmatmul.f32.gmra.mxu0 %v532
    %v613 = vpop.f32.mrf.mxu0
    %v614 = vadd.f32 0.0, %v613
    %615 = vdwg.mxu0
    %v616 = vadd.f32 %v552, %v614
    %v617 = vadd.f32 %v555, %v611
    %v618 = vadd.f32 %v558, %v608
    %v619 = vadd.f32 %v561, %v605
    %v620 = vadd.f32 %v564, %v602
    %v621 = vadd.f32 %v567, %v599
    %v622 = vadd.f32 %v570, %v596
    %v623 = vadd.f32 %v573, %v593
    %s624 = scalar_lea.vmem %s3, 32
    %v625 = vld [vmem:[%s624] sm:$0xff]
    %v626 = vld [vmem:[%s624 + $0x8] sm:$0xff]
    %v627 = vld [vmem:[%s624 + $0x10] sm:$0xff]
    %v628 = vld [vmem:[%s624 + $0x18] sm:$0xff]
    %s629 = scalar_lea.vmem %s4, 1
    %v630 = vld [vmem:[%s629] sm:$0x1]
    %v631 = vsel %vm125, %v616, %v623
    %v633 = vperm.slane %v630, 0
    %v635 = vadd.f32 %v631, %v633
    %v636 = vsel %vm125, %v617, %v622
    %v637 = vadd.f32 %v636, %v633
    %v638 = vsel %vm125, %v618, %v621
    %v639 = vadd.f32 %v638, %v633
    %v640 = vsel %vm125, %v619, %v620
    %v641 = vadd.f32 %v640, %v633
    %v642 = vsel %vm125, %v620, %v619
    %v643 = vadd.f32 %v642, %v633
    %v644 = vsel %vm125, %v621, %v618
    %v645 = vadd.f32 %v644, %v633
    %v646 = vsel %vm125, %v622, %v617
    %v647 = vadd.f32 %v646, %v633
    %v648 = vsel %vm125, %v623, %v616
    %v649 = vadd.f32 %v648, %v633
    %650 = vmatpush.msra.mxu0 0.0
    %651 = vmatpush.msra.mxu0 0.0
    %652 = vmatpush.msra.mxu0 0.0
    %653 = vmatpush.msra.mxu0 0.0
    %654 = vmatpush.msra.mxu0 0.0
    %655 = vmatpush.msra.mxu0 0.0
    %656 = vmatpush.msra.mxu0 0.0
    %657 = vmatpush.msra.mxu0 0.0
    %658 = vmatpush.msra.mxu0 0.0
    %659 = vmatpush.msra.mxu0 0.0
    %660 = vmatpush.msra.mxu0 0.0
    %661 = vmatpush.msra.mxu0 0.0
    %662 = vmatpush.msra.mxu0 %v628
    %663 = vmatpush.msra.mxu0 %v627
    %664 = vmatpush.msra.mxu0 %v626
    %665 = vmatpush.msra.mxu0 %v625
    %666 = vmatmul.f32.gmra.mxu0 %v147
    %v667 = vpop.f32.mrf.mxu0
    %v668 = vadd.f32 0.0, %v667
    %669 = vdwg.mxu0
    %v670 = vadd.f32 %v635, %v668
    %v671 = vmul.f32 %v47, %v670
    %v672 = vtanh.pop %v671
    %v673 = vmul.f32 %v47, %v672
    %v674 = vadd.f32 %v673, %v48
    %v675 = vmul.f32 %v674, 0.0
    %677 = vrot.lane.b32.xlu0 %v674, 64
    %v678 = vpop.permute.xlu0 %677
    %v680 = vmul.f32 %v674, %v678
    %682 = vrot.lane.b32.xlu0 %v680, 32
    %v683 = vpop.permute.xlu0 %682
    %v685 = vadd.f32 %v675, %v683
    %v686 = vtanh.pop %v685
    %688 = vrot.lane.b32.xlu0 %v686, 64
    %v689 = vpop.permute.xlu0 %688
    %v691 = vmul.f32 %v674, %v689
    %693 = vrot.lane.b32.xlu0 %v691, 32
    %v694 = vpop.permute.xlu0 %693
    %v695 = vsel %vm145, %v694, 0
    %697 = vmatpush.msra.mxu0 0.0
    %698 = vmatpush.msra.mxu0 0.0
    %699 = vmatpush.msra.mxu0 0.0
    %700 = vmatpush.msra.mxu0 0.0
    %701 = vmatpush.msra.mxu0 0.0
    %702 = vmatpush.msra.mxu0 0.0
    %703 = vmatpush.msra.mxu0 0.0
    %704 = vmatpush.msra.mxu0 0.0
    %705 = vmatpush.msra.mxu0 0.0
    %706 = vmatpush.msra.mxu0 0.0
    %707 = vmatpush.msra.mxu0 0.0
    %708 = vmatpush.msra.mxu0 0.0
    %709 = vmatpush.msra.mxu0 %v628
    %710 = vmatpush.msra.mxu0 %v627
    %711 = vmatpush.msra.mxu0 %v626
    %712 = vmatpush.msra.mxu0 %v625
    %713 = vmatmul.f32.gmra.mxu0 %v695
    %v714 = vpop.f32.mrf.mxu0
    %v715 = vadd.f32 0.0, %v714
    %716 = vdwg.mxu0
    %v717 = vadd.f32 %v637, %v715
    %v718 = vmul.f32 %v47, %v717
    %v719 = vtanh.pop %v718
    %v720 = vmul.f32 %v47, %v719
    %v721 = vadd.f32 %v720, %v48
    %v722 = vmul.f32 %v721, %v685
    %724 = vrot.lane.b32.xlu0 %v721, 64
    %v725 = vpop.permute.xlu0 %724
    %v727 = vmul.f32 %v721, %v725
    %729 = vrot.lane.b32.xlu0 %v727, 32
    %v730 = vpop.permute.xlu0 %729
    %v732 = vadd.f32 %v722, %v730
    %v733 = vtanh.pop %v732
    %735 = vrot.lane.b32.xlu0 %v733, 64
    %v736 = vpop.permute.xlu0 %735
    %v738 = vmul.f32 %v721, %v736
    %740 = vrot.lane.b32.xlu0 %v738, 32
    %v741 = vpop.permute.xlu0 %740
    %v742 = vsel %vm145, %v741, 0
    %744 = vmatpush.msra.mxu0 0.0
    %745 = vmatpush.msra.mxu0 0.0
    %746 = vmatpush.msra.mxu0 0.0
    %747 = vmatpush.msra.mxu0 0.0
    %748 = vmatpush.msra.mxu0 0.0
    %749 = vmatpush.msra.mxu0 0.0
    %750 = vmatpush.msra.mxu0 0.0
    %751 = vmatpush.msra.mxu0 0.0
    %752 = vmatpush.msra.mxu0 0.0
    %753 = vmatpush.msra.mxu0 0.0
    %754 = vmatpush.msra.mxu0 0.0
    %755 = vmatpush.msra.mxu0 0.0
    %756 = vmatpush.msra.mxu0 %v628
    %757 = vmatpush.msra.mxu0 %v627
    %758 = vmatpush.msra.mxu0 %v626
    %759 = vmatpush.msra.mxu0 %v625
    %760 = vmatmul.f32.gmra.mxu0 %v742
    %v761 = vpop.f32.mrf.mxu0
    %v762 = vadd.f32 0.0, %v761
    %763 = vdwg.mxu0
    %v764 = vadd.f32 %v639, %v762
    %v765 = vmul.f32 %v47, %v764
    %v766 = vtanh.pop %v765
    %v767 = vmul.f32 %v47, %v766
    %v768 = vadd.f32 %v767, %v48
    %v769 = vmul.f32 %v768, %v732
    %771 = vrot.lane.b32.xlu0 %v768, 64
    %v772 = vpop.permute.xlu0 %771
    %v774 = vmul.f32 %v768, %v772
    %776 = vrot.lane.b32.xlu0 %v774, 32
    %v777 = vpop.permute.xlu0 %776
    %v779 = vadd.f32 %v769, %v777
    %v780 = vtanh.pop %v779
    %782 = vrot.lane.b32.xlu0 %v780, 64
    %v783 = vpop.permute.xlu0 %782
    %v785 = vmul.f32 %v768, %v783
    %787 = vrot.lane.b32.xlu0 %v785, 32
    %v788 = vpop.permute.xlu0 %787
    %v789 = vsel %vm145, %v788, 0
    %791 = vmatpush.msra.mxu0 0.0
    %792 = vmatpush.msra.mxu0 0.0
    %793 = vmatpush.msra.mxu0 0.0
    %794 = vmatpush.msra.mxu0 0.0
    %795 = vmatpush.msra.mxu0 0.0
    %796 = vmatpush.msra.mxu0 0.0
    %797 = vmatpush.msra.mxu0 0.0
    %798 = vmatpush.msra.mxu0 0.0
    %799 = vmatpush.msra.mxu0 0.0
    %800 = vmatpush.msra.mxu0 0.0
    %801 = vmatpush.msra.mxu0 0.0
    %802 = vmatpush.msra.mxu0 0.0
    %803 = vmatpush.msra.mxu0 %v628
    %804 = vmatpush.msra.mxu0 %v627
    %805 = vmatpush.msra.mxu0 %v626
    %806 = vmatpush.msra.mxu0 %v625
    %807 = vmatmul.f32.gmra.mxu0 %v789
    %v808 = vpop.f32.mrf.mxu0
    %v809 = vadd.f32 0.0, %v808
    %810 = vdwg.mxu0
    %v811 = vadd.f32 %v641, %v809
    %v812 = vmul.f32 %v47, %v811
    %v813 = vtanh.pop %v812
    %v814 = vmul.f32 %v47, %v813
    %v815 = vadd.f32 %v814, %v48
    %v816 = vmul.f32 %v815, %v779
    %818 = vrot.lane.b32.xlu0 %v815, 64
    %v819 = vpop.permute.xlu0 %818
    %v821 = vmul.f32 %v815, %v819
    %823 = vrot.lane.b32.xlu0 %v821, 32
    %v824 = vpop.permute.xlu0 %823
    %v826 = vadd.f32 %v816, %v824
    %v827 = vtanh.pop %v826
    %829 = vrot.lane.b32.xlu0 %v827, 64
    %v830 = vpop.permute.xlu0 %829
    %v832 = vmul.f32 %v815, %v830
    %834 = vrot.lane.b32.xlu0 %v832, 32
    %v835 = vpop.permute.xlu0 %834
    %v836 = vsel %vm145, %v835, 0
    %838 = vmatpush.msra.mxu0 0.0
    %839 = vmatpush.msra.mxu0 0.0
    %840 = vmatpush.msra.mxu0 0.0
    %841 = vmatpush.msra.mxu0 0.0
    %842 = vmatpush.msra.mxu0 0.0
    %843 = vmatpush.msra.mxu0 0.0
    %844 = vmatpush.msra.mxu0 0.0
    %845 = vmatpush.msra.mxu0 0.0
    %846 = vmatpush.msra.mxu0 0.0
    %847 = vmatpush.msra.mxu0 0.0
    %848 = vmatpush.msra.mxu0 0.0
    %849 = vmatpush.msra.mxu0 0.0
    %850 = vmatpush.msra.mxu0 %v628
    %851 = vmatpush.msra.mxu0 %v627
    %852 = vmatpush.msra.mxu0 %v626
    %853 = vmatpush.msra.mxu0 %v625
    %854 = vmatmul.f32.gmra.mxu0 %v836
    %v855 = vpop.f32.mrf.mxu0
    %v856 = vadd.f32 0.0, %v855
    %857 = vdwg.mxu0
    %v858 = vadd.f32 %v643, %v856
    %v859 = vmul.f32 %v47, %v858
    %v860 = vtanh.pop %v859
    %v861 = vmul.f32 %v47, %v860
    %v862 = vadd.f32 %v861, %v48
    %v863 = vmul.f32 %v862, %v826
    %865 = vrot.lane.b32.xlu0 %v862, 64
    %v866 = vpop.permute.xlu0 %865
    %v868 = vmul.f32 %v862, %v866
    %870 = vrot.lane.b32.xlu0 %v868, 32
    %v871 = vpop.permute.xlu0 %870
    %v873 = vadd.f32 %v863, %v871
    %v874 = vtanh.pop %v873
    %876 = vrot.lane.b32.xlu0 %v874, 64
    %v877 = vpop.permute.xlu0 %876
    %v879 = vmul.f32 %v862, %v877
    %881 = vrot.lane.b32.xlu0 %v879, 32
    %v882 = vpop.permute.xlu0 %881
    %v883 = vsel %vm145, %v882, 0
    %885 = vmatpush.msra.mxu0 0.0
    %886 = vmatpush.msra.mxu0 0.0
    %887 = vmatpush.msra.mxu0 0.0
    %888 = vmatpush.msra.mxu0 0.0
    %889 = vmatpush.msra.mxu0 0.0
    %890 = vmatpush.msra.mxu0 0.0
    %891 = vmatpush.msra.mxu0 0.0
    %892 = vmatpush.msra.mxu0 0.0
    %893 = vmatpush.msra.mxu0 0.0
    %894 = vmatpush.msra.mxu0 0.0
    %895 = vmatpush.msra.mxu0 0.0
    %896 = vmatpush.msra.mxu0 0.0
    %897 = vmatpush.msra.mxu0 %v628
    %898 = vmatpush.msra.mxu0 %v627
    %899 = vmatpush.msra.mxu0 %v626
    %900 = vmatpush.msra.mxu0 %v625
    %901 = vmatmul.f32.gmra.mxu0 %v883
    %v902 = vpop.f32.mrf.mxu0
    %v903 = vadd.f32 0.0, %v902
    %904 = vdwg.mxu0
    %v905 = vadd.f32 %v645, %v903
    %v906 = vmul.f32 %v47, %v905
    %v907 = vtanh.pop %v906
    %v908 = vmul.f32 %v47, %v907
    %v909 = vadd.f32 %v908, %v48
    %v910 = vmul.f32 %v909, %v873
    %912 = vrot.lane.b32.xlu0 %v909, 64
    %v913 = vpop.permute.xlu0 %912
    %v915 = vmul.f32 %v909, %v913
    %917 = vrot.lane.b32.xlu0 %v915, 32
    %v918 = vpop.permute.xlu0 %917
    %v920 = vadd.f32 %v910, %v918
    %v921 = vtanh.pop %v920
    %923 = vrot.lane.b32.xlu0 %v921, 64
    %v924 = vpop.permute.xlu0 %923
    %v926 = vmul.f32 %v909, %v924
    %928 = vrot.lane.b32.xlu0 %v926, 32
    %v929 = vpop.permute.xlu0 %928
    %v930 = vsel %vm145, %v929, 0
    %932 = vmatpush.msra.mxu0 0.0
    %933 = vmatpush.msra.mxu0 0.0
    %934 = vmatpush.msra.mxu0 0.0
    %935 = vmatpush.msra.mxu0 0.0
    %936 = vmatpush.msra.mxu0 0.0
    %937 = vmatpush.msra.mxu0 0.0
    %938 = vmatpush.msra.mxu0 0.0
    %939 = vmatpush.msra.mxu0 0.0
    %940 = vmatpush.msra.mxu0 0.0
    %941 = vmatpush.msra.mxu0 0.0
    %942 = vmatpush.msra.mxu0 0.0
    %943 = vmatpush.msra.mxu0 0.0
    %944 = vmatpush.msra.mxu0 %v628
    %945 = vmatpush.msra.mxu0 %v627
    %946 = vmatpush.msra.mxu0 %v626
    %947 = vmatpush.msra.mxu0 %v625
    %948 = vmatmul.f32.gmra.mxu0 %v930
    %v949 = vpop.f32.mrf.mxu0
    %v950 = vadd.f32 0.0, %v949
    %951 = vdwg.mxu0
    %v952 = vadd.f32 %v647, %v950
    %v953 = vmul.f32 %v47, %v952
    %v954 = vtanh.pop %v953
    %v955 = vmul.f32 %v47, %v954
    %v956 = vadd.f32 %v955, %v48
    %v957 = vmul.f32 %v956, %v920
    %959 = vrot.lane.b32.xlu0 %v956, 64
    %v960 = vpop.permute.xlu0 %959
    %v962 = vmul.f32 %v956, %v960
    %964 = vrot.lane.b32.xlu0 %v962, 32
    %v965 = vpop.permute.xlu0 %964
    %v967 = vadd.f32 %v957, %v965
    %v968 = vtanh.pop %v967
    %970 = vrot.lane.b32.xlu0 %v968, 64
    %v971 = vpop.permute.xlu0 %970
    %v973 = vmul.f32 %v956, %v971
    %975 = vrot.lane.b32.xlu0 %v973, 32
    %v976 = vpop.permute.xlu0 %975
    %v977 = vsel %vm145, %v976, 0
    %979 = vmatpush.msra.mxu0 0.0
    %980 = vmatpush.msra.mxu0 0.0
    %981 = vmatpush.msra.mxu0 0.0
    %982 = vmatpush.msra.mxu0 0.0
    %983 = vmatpush.msra.mxu0 0.0
    %984 = vmatpush.msra.mxu0 0.0
    %985 = vmatpush.msra.mxu0 0.0
    %986 = vmatpush.msra.mxu0 0.0
    %987 = vmatpush.msra.mxu0 0.0
    %988 = vmatpush.msra.mxu0 0.0
    %989 = vmatpush.msra.mxu0 0.0
    %990 = vmatpush.msra.mxu0 0.0
    %991 = vmatpush.msra.mxu0 %v628
    %992 = vmatpush.msra.mxu0 %v627
    %993 = vmatpush.msra.mxu0 %v626
    %994 = vmatpush.msra.mxu0 %v625
    %995 = vmatmul.f32.gmra.mxu0 %v977
    %v996 = vpop.f32.mrf.mxu0
    %v997 = vadd.f32 0.0, %v996
    %998 = vdwg.mxu0
    %v999 = vadd.f32 %v649, %v997
    %v1000 = vmul.f32 %v47, %v999
    %v1001 = vtanh.pop %v1000
    %v1002 = vmul.f32 %v47, %v1001
    %v1003 = vadd.f32 %v1002, %v48
    %v1004 = vmul.f32 %v1003, %v967
    %1006 = vrot.lane.b32.xlu0 %v1003, 64
    %v1007 = vpop.permute.xlu0 %1006
    %v1009 = vmul.f32 %v1003, %v1007
    %1011 = vrot.lane.b32.xlu0 %v1009, 32
    %v1012 = vpop.permute.xlu0 %1011
    %v1014 = vadd.f32 %v1004, %v1012
    %v1015 = vtanh.pop %v1014
    %1017 = vrot.lane.b32.xlu0 %v1015, 64
    %v1018 = vpop.permute.xlu0 %1017
    %v1020 = vmul.f32 %v1003, %v1018
    %s1021 = scalar_lea.vmem [#allocation2], 64
    %v1022 = vld [vmem:[%s1021] sm:$0xff]
    %v1023 = vld [vmem:[%s1021 + $0x8] sm:$0xff]
    %v1024 = vld [vmem:[%s1021 + $0x10] sm:$0xff]
    %v1025 = vld [vmem:[%s1021 + $0x18] sm:$0xff]
    %s1026 = scalar_lea.vmem [#allocation2], 96
    %v1027 = vld [vmem:[%s1026] sm:$0xff]
    %v1028 = vld [vmem:[%s1026 + $0x8] sm:$0xff]
    %v1029 = vld [vmem:[%s1026 + $0x10] sm:$0xff]
    %v1030 = vld [vmem:[%s1026 + $0x18] sm:$0xff]
    %1032 = vrot.lane.b32.xlu0 %v1020, 32
    %v1033 = vpop.permute.xlu0 %1032
    %v1034 = vsel %vm145, %v1033, 0
    %1036 = vmatpush.msra.mxu0 0.0
    %1037 = vmatpush.msra.mxu0 0.0
    %1038 = vmatpush.msra.mxu0 0.0
    %1039 = vmatpush.msra.mxu0 0.0
    %1040 = vmatpush.msra.mxu0 0.0
    %1041 = vmatpush.msra.mxu0 0.0
    %1042 = vmatpush.msra.mxu0 0.0
    %1043 = vmatpush.msra.mxu0 0.0
    %1044 = vmatpush.msra.mxu0 0.0
    %1045 = vmatpush.msra.mxu0 0.0
    %1046 = vmatpush.msra.mxu0 0.0
    %1047 = vmatpush.msra.mxu0 0.0
    %1048 = vmatpush.msra.mxu0 %v1025
    %1049 = vmatpush.msra.mxu0 %v1024
    %1050 = vmatpush.msra.mxu0 %v1023
    %1051 = vmatpush.msra.mxu0 %v1022
    %1052 = vmatmul.f32.gmra.mxu0 %v695
    %v1053 = vpop.f32.mrf.mxu0
    %v1054 = vadd.f32 0.0, %v1053
    %1055 = vmatmul.f32.gmra.mxu0 %v742
    %v1056 = vpop.f32.mrf.mxu0
    %v1057 = vadd.f32 0.0, %v1056
    %1058 = vmatmul.f32.gmra.mxu0 %v789
    %v1059 = vpop.f32.mrf.mxu0
    %v1060 = vadd.f32 0.0, %v1059
    %1061 = vmatmul.f32.gmra.mxu0 %v836
    %v1062 = vpop.f32.mrf.mxu0
    %v1063 = vadd.f32 0.0, %v1062
    %1064 = vmatmul.f32.gmra.mxu0 %v883
    %v1065 = vpop.f32.mrf.mxu0
    %v1066 = vadd.f32 0.0, %v1065
    %1067 = vmatmul.f32.gmra.mxu0 %v930
    %v1068 = vpop.f32.mrf.mxu0
    %v1069 = vadd.f32 0.0, %v1068
    %1070 = vmatmul.f32.gmra.mxu0 %v977
    %v1071 = vpop.f32.mrf.mxu0
    %v1072 = vadd.f32 0.0, %v1071
    %1073 = vmatmul.f32.gmra.mxu0 %v1034
    %v1074 = vpop.f32.mrf.mxu0
    %v1075 = vadd.f32 0.0, %v1074
    %1076 = vdwg.mxu0
    %1077 = vmatpush.msra.mxu0 0.0
    %1078 = vmatpush.msra.mxu0 0.0
    %1079 = vmatpush.msra.mxu0 0.0
    %1080 = vmatpush.msra.mxu0 0.0
    %1081 = vmatpush.msra.mxu0 0.0
    %1082 = vmatpush.msra.mxu0 0.0
    %1083 = vmatpush.msra.mxu0 0.0
    %1084 = vmatpush.msra.mxu0 0.0
    %1085 = vmatpush.msra.mxu0 0.0
    %1086 = vmatpush.msra.mxu0 0.0
    %1087 = vmatpush.msra.mxu0 0.0
    %1088 = vmatpush.msra.mxu0 0.0
    %1089 = vmatpush.msra.mxu0 %v1030
    %1090 = vmatpush.msra.mxu0 %v1029
    %1091 = vmatpush.msra.mxu0 %v1028
    %1092 = vmatpush.msra.mxu0 %v1027
    %1093 = vmatmul.f32.gmra.mxu0 %v695
    %v1094 = vpop.f32.mrf.mxu0
    %v1095 = vadd.f32 0.0, %v1094
    %1096 = vmatmul.f32.gmra.mxu0 %v742
    %v1097 = vpop.f32.mrf.mxu0
    %v1098 = vadd.f32 0.0, %v1097
    %1099 = vmatmul.f32.gmra.mxu0 %v789
    %v1100 = vpop.f32.mrf.mxu0
    %v1101 = vadd.f32 0.0, %v1100
    %1102 = vmatmul.f32.gmra.mxu0 %v836
    %v1103 = vpop.f32.mrf.mxu0
    %v1104 = vadd.f32 0.0, %v1103
    %1105 = vmatmul.f32.gmra.mxu0 %v883
    %v1106 = vpop.f32.mrf.mxu0
    %v1107 = vadd.f32 0.0, %v1106
    %1108 = vmatmul.f32.gmra.mxu0 %v930
    %v1109 = vpop.f32.mrf.mxu0
    %v1110 = vadd.f32 0.0, %v1109
    %1111 = vmatmul.f32.gmra.mxu0 %v977
    %v1112 = vpop.f32.mrf.mxu0
    %v1113 = vadd.f32 0.0, %v1112
    %1114 = vmatmul.f32.gmra.mxu0 %v1034
    %v1115 = vpop.f32.mrf.mxu0
    %v1116 = vadd.f32 0.0, %v1115
    %1117 = vdwg.mxu0
    %v1118 = vadd.f32 %v1054, %v1116
    %v1119 = vadd.f32 %v1057, %v1113
    %v1120 = vadd.f32 %v1060, %v1110
    %v1121 = vadd.f32 %v1063, %v1107
    %v1122 = vadd.f32 %v1066, %v1104
    %v1123 = vadd.f32 %v1069, %v1101
    %v1124 = vadd.f32 %v1072, %v1098
    %v1125 = vadd.f32 %v1075, %v1095
    %s1126 = scalar_lea.vmem %s3, 64
    %v1127 = vld [vmem:[%s1126] sm:$0xff]
    %v1128 = vld [vmem:[%s1126 + $0x8] sm:$0xff]
    %v1129 = vld [vmem:[%s1126 + $0x10] sm:$0xff]
    %v1130 = vld [vmem:[%s1126 + $0x18] sm:$0xff]
    %s1131 = scalar_lea.vmem %s4, 2
    %v1132 = vld [vmem:[%s1131] sm:$0x1]
    %v1133 = vsel %vm125, %v1118, %v1125
    %v1135 = vperm.slane %v1132, 0
    %v1137 = vadd.f32 %v1133, %v1135
    %v1138 = vsel %vm125, %v1119, %v1124
    %v1139 = vadd.f32 %v1138, %v1135
    %v1140 = vsel %vm125, %v1120, %v1123
    %v1141 = vadd.f32 %v1140, %v1135
    %v1142 = vsel %vm125, %v1121, %v1122
    %v1143 = vadd.f32 %v1142, %v1135
    %v1144 = vsel %vm125, %v1122, %v1121
    %v1145 = vadd.f32 %v1144, %v1135
    %v1146 = vsel %vm125, %v1123, %v1120
    %v1147 = vadd.f32 %v1146, %v1135
    %v1148 = vsel %vm125, %v1124, %v1119
    %v1149 = vadd.f32 %v1148, %v1135
    %v1150 = vsel %vm125, %v1125, %v1118
    %v1151 = vadd.f32 %v1150, %v1135
    %1152 = vmatpush.msra.mxu0 0.0
    %1153 = vmatpush.msra.mxu0 0.0
    %1154 = vmatpush.msra.mxu0 0.0
    %1155 = vmatpush.msra.mxu0 0.0
    %1156 = vmatpush.msra.mxu0 0.0
    %1157 = vmatpush.msra.mxu0 0.0
    %1158 = vmatpush.msra.mxu0 0.0
    %1159 = vmatpush.msra.mxu0 0.0
    %1160 = vmatpush.msra.mxu0 0.0
    %1161 = vmatpush.msra.mxu0 0.0
    %1162 = vmatpush.msra.mxu0 0.0
    %1163 = vmatpush.msra.mxu0 0.0
    %1164 = vmatpush.msra.mxu0 %v1130
    %1165 = vmatpush.msra.mxu0 %v1129
    %1166 = vmatpush.msra.mxu0 %v1128
    %1167 = vmatpush.msra.mxu0 %v1127
    %1168 = vmatmul.f32.gmra.mxu0 %v147
    %v1169 = vpop.f32.mrf.mxu0
    %v1170 = vadd.f32 0.0, %v1169
    %1171 = vdwg.mxu0
    %v1172 = vadd.f32 %v1137, %v1170
    %v1173 = vmul.f32 %v47, %v1172
    %v1174 = vtanh.pop %v1173
    %v1175 = vmul.f32 %v47, %v1174
    %v1176 = vadd.f32 %v1175, %v48
    %v1177 = vmul.f32 %v1176, 0.0
    %1179 = vrot.lane.b32.xlu0 %v1176, 64
    %v1180 = vpop.permute.xlu0 %1179
    %v1182 = vmul.f32 %v1176, %v1180
    %1184 = vrot.lane.b32.xlu0 %v1182, 32
    %v1185 = vpop.permute.xlu0 %1184
    %v1187 = vadd.f32 %v1177, %v1185
    %v1188 = vtanh.pop %v1187
    %1190 = vrot.lane.b32.xlu0 %v1188, 64
    %v1191 = vpop.permute.xlu0 %1190
    %v1193 = vmul.f32 %v1176, %v1191
    %1195 = vrot.lane.b32.xlu0 %v1193, 32
    %v1196 = vpop.permute.xlu0 %1195
    %v1197 = vsel %vm145, %v1196, 0
    %1199 = vmatpush.msra.mxu0 0.0
    %1200 = vmatpush.msra.mxu0 0.0
    %1201 = vmatpush.msra.mxu0 0.0
    %1202 = vmatpush.msra.mxu0 0.0
    %1203 = vmatpush.msra.mxu0 0.0
    %1204 = vmatpush.msra.mxu0 0.0
    %1205 = vmatpush.msra.mxu0 0.0
    %1206 = vmatpush.msra.mxu0 0.0
    %1207 = vmatpush.msra.mxu0 0.0
    %1208 = vmatpush.msra.mxu0 0.0
    %1209 = vmatpush.msra.mxu0 0.0
    %1210 = vmatpush.msra.mxu0 0.0
    %1211 = vmatpush.msra.mxu0 %v1130
    %1212 = vmatpush.msra.mxu0 %v1129
    %1213 = vmatpush.msra.mxu0 %v1128
    %1214 = vmatpush.msra.mxu0 %v1127
    %1215 = vmatmul.f32.gmra.mxu0 %v1197
    %v1216 = vpop.f32.mrf.mxu0
    %v1217 = vadd.f32 0.0, %v1216
    %1218 = vdwg.mxu0
    %v1219 = vadd.f32 %v1139, %v1217
    %v1220 = vmul.f32 %v47, %v1219
    %v1221 = vtanh.pop %v1220
    %v1222 = vmul.f32 %v47, %v1221
    %v1223 = vadd.f32 %v1222, %v48
    %v1224 = vmul.f32 %v1223, %v1187
    %1226 = vrot.lane.b32.xlu0 %v1223, 64
    %v1227 = vpop.permute.xlu0 %1226
    %v1229 = vmul.f32 %v1223, %v1227
    %1231 = vrot.lane.b32.xlu0 %v1229, 32
    %v1232 = vpop.permute.xlu0 %1231
    %v1234 = vadd.f32 %v1224, %v1232
    %v1235 = vtanh.pop %v1234
    %1237 = vrot.lane.b32.xlu0 %v1235, 64
    %v1238 = vpop.permute.xlu0 %1237
    %v1240 = vmul.f32 %v1223, %v1238
    %1242 = vrot.lane.b32.xlu0 %v1240, 32
    %v1243 = vpop.permute.xlu0 %1242
    %v1244 = vsel %vm145, %v1243, 0
    %1246 = vmatpush.msra.mxu0 0.0
    %1247 = vmatpush.msra.mxu0 0.0
    %1248 = vmatpush.msra.mxu0 0.0
    %1249 = vmatpush.msra.mxu0 0.0
    %1250 = vmatpush.msra.mxu0 0.0
    %1251 = vmatpush.msra.mxu0 0.0
    %1252 = vmatpush.msra.mxu0 0.0
    %1253 = vmatpush.msra.mxu0 0.0
    %1254 = vmatpush.msra.mxu0 0.0
    %1255 = vmatpush.msra.mxu0 0.0
    %1256 = vmatpush.msra.mxu0 0.0
    %1257 = vmatpush.msra.mxu0 0.0
    %1258 = vmatpush.msra.mxu0 %v1130
    %1259 = vmatpush.msra.mxu0 %v1129
    %1260 = vmatpush.msra.mxu0 %v1128
    %1261 = vmatpush.msra.mxu0 %v1127
    %1262 = vmatmul.f32.gmra.mxu0 %v1244
    %v1263 = vpop.f32.mrf.mxu0
    %v1264 = vadd.f32 0.0, %v1263
    %1265 = vdwg.mxu0
    %v1266 = vadd.f32 %v1141, %v1264
    %v1267 = vmul.f32 %v47, %v1266
    %v1268 = vtanh.pop %v1267
    %v1269 = vmul.f32 %v47, %v1268
    %v1270 = vadd.f32 %v1269, %v48
    %v1271 = vmul.f32 %v1270, %v1234
    %1273 = vrot.lane.b32.xlu0 %v1270, 64
    %v1274 = vpop.permute.xlu0 %1273
    %v1276 = vmul.f32 %v1270, %v1274
    %1278 = vrot.lane.b32.xlu0 %v1276, 32
    %v1279 = vpop.permute.xlu0 %1278
    %v1281 = vadd.f32 %v1271, %v1279
    %v1282 = vtanh.pop %v1281
    %1284 = vrot.lane.b32.xlu0 %v1282, 64
    %v1285 = vpop.permute.xlu0 %1284
    %v1287 = vmul.f32 %v1270, %v1285
    %1289 = vrot.lane.b32.xlu0 %v1287, 32
    %v1290 = vpop.permute.xlu0 %1289
    %v1291 = vsel %vm145, %v1290, 0
    %1293 = vmatpush.msra.mxu0 0.0
    %1294 = vmatpush.msra.mxu0 0.0
    %1295 = vmatpush.msra.mxu0 0.0
    %1296 = vmatpush.msra.mxu0 0.0
    %1297 = vmatpush.msra.mxu0 0.0
    %1298 = vmatpush.msra.mxu0 0.0
    %1299 = vmatpush.msra.mxu0 0.0
    %1300 = vmatpush.msra.mxu0 0.0
    %1301 = vmatpush.msra.mxu0 0.0
    %1302 = vmatpush.msra.mxu0 0.0
    %1303 = vmatpush.msra.mxu0 0.0
    %1304 = vmatpush.msra.mxu0 0.0
    %1305 = vmatpush.msra.mxu0 %v1130
    %1306 = vmatpush.msra.mxu0 %v1129
    %1307 = vmatpush.msra.mxu0 %v1128
    %1308 = vmatpush.msra.mxu0 %v1127
    %1309 = vmatmul.f32.gmra.mxu0 %v1291
    %v1310 = vpop.f32.mrf.mxu0
    %v1311 = vadd.f32 0.0, %v1310
    %1312 = vdwg.mxu0
    %v1313 = vadd.f32 %v1143, %v1311
    %v1314 = vmul.f32 %v47, %v1313
    %v1315 = vtanh.pop %v1314
    %v1316 = vmul.f32 %v47, %v1315
    %v1317 = vadd.f32 %v1316, %v48
    %v1318 = vmul.f32 %v1317, %v1281
    %1320 = vrot.lane.b32.xlu0 %v1317, 64
    %v1321 = vpop.permute.xlu0 %1320
    %v1323 = vmul.f32 %v1317, %v1321
    %1325 = vrot.lane.b32.xlu0 %v1323, 32
    %v1326 = vpop.permute.xlu0 %1325
    %v1328 = vadd.f32 %v1318, %v1326
    %v1329 = vtanh.pop %v1328
    %1331 = vrot.lane.b32.xlu0 %v1329, 64
    %v1332 = vpop.permute.xlu0 %1331
    %v1334 = vmul.f32 %v1317, %v1332
    %1336 = vrot.lane.b32.xlu0 %v1334, 32
    %v1337 = vpop.permute.xlu0 %1336
    %v1338 = vsel %vm145, %v1337, 0
    %1340 = vmatpush.msra.mxu0 0.0
    %1341 = vmatpush.msra.mxu0 0.0
    %1342 = vmatpush.msra.mxu0 0.0
    %1343 = vmatpush.msra.mxu0 0.0
    %1344 = vmatpush.msra.mxu0 0.0
    %1345 = vmatpush.msra.mxu0 0.0
    %1346 = vmatpush.msra.mxu0 0.0
    %1347 = vmatpush.msra.mxu0 0.0
    %1348 = vmatpush.msra.mxu0 0.0
    %1349 = vmatpush.msra.mxu0 0.0
    %1350 = vmatpush.msra.mxu0 0.0
    %1351 = vmatpush.msra.mxu0 0.0
    %1352 = vmatpush.msra.mxu0 %v1130
    %1353 = vmatpush.msra.mxu0 %v1129
    %1354 = vmatpush.msra.mxu0 %v1128
    %1355 = vmatpush.msra.mxu0 %v1127
    %1356 = vmatmul.f32.gmra.mxu0 %v1338
    %v1357 = vpop.f32.mrf.mxu0
    %v1358 = vadd.f32 0.0, %v1357
    %1359 = vdwg.mxu0
    %v1360 = vadd.f32 %v1145, %v1358
    %v1361 = vmul.f32 %v47, %v1360
    %v1362 = vtanh.pop %v1361
    %v1363 = vmul.f32 %v47, %v1362
    %v1364 = vadd.f32 %v1363, %v48
    %v1365 = vmul.f32 %v1364, %v1328
    %1367 = vrot.lane.b32.xlu0 %v1364, 64
    %v1368 = vpop.permute.xlu0 %1367
    %v1370 = vmul.f32 %v1364, %v1368
    %1372 = vrot.lane.b32.xlu0 %v1370, 32
    %v1373 = vpop.permute.xlu0 %1372
    %v1375 = vadd.f32 %v1365, %v1373
    %v1376 = vtanh.pop %v1375
    %1378 = vrot.lane.b32.xlu0 %v1376, 64
    %v1379 = vpop.permute.xlu0 %1378
    %v1381 = vmul.f32 %v1364, %v1379
    %1383 = vrot.lane.b32.xlu0 %v1381, 32
    %v1384 = vpop.permute.xlu0 %1383
    %v1385 = vsel %vm145, %v1384, 0
    %1387 = vmatpush.msra.mxu0 0.0
    %1388 = vmatpush.msra.mxu0 0.0
    %1389 = vmatpush.msra.mxu0 0.0
    %1390 = vmatpush.msra.mxu0 0.0
    %1391 = vmatpush.msra.mxu0 0.0
    %1392 = vmatpush.msra.mxu0 0.0
    %1393 = vmatpush.msra.mxu0 0.0
    %1394 = vmatpush.msra.mxu0 0.0
    %1395 = vmatpush.msra.mxu0 0.0
    %1396 = vmatpush.msra.mxu0 0.0
    %1397 = vmatpush.msra.mxu0 0.0
    %1398 = vmatpush.msra.mxu0 0.0
    %1399 = vmatpush.msra.mxu0 %v1130
    %1400 = vmatpush.msra.mxu0 %v1129
    %1401 = vmatpush.msra.mxu0 %v1128
    %1402 = vmatpush.msra.mxu0 %v1127
    %1403 = vmatmul.f32.gmra.mxu0 %v1385
    %v1404 = vpop.f32.mrf.mxu0
    %v1405 = vadd.f32 0.0, %v1404
    %1406 = vdwg.mxu0
    %v1407 = vadd.f32 %v1147, %v1405
    %v1408 = vmul.f32 %v47, %v1407
    %v1409 = vtanh.pop %v1408
    %v1410 = vmul.f32 %v47, %v1409
    %v1411 = vadd.f32 %v1410, %v48
    %v1412 = vmul.f32 %v1411, %v1375
    %1414 = vrot.lane.b32.xlu0 %v1411, 64
    %v1415 = vpop.permute.xlu0 %1414
    %v1417 = vmul.f32 %v1411, %v1415
    %1419 = vrot.lane.b32.xlu0 %v1417, 32
    %v1420 = vpop.permute.xlu0 %1419
    %v1422 = vadd.f32 %v1412, %v1420
    %v1423 = vtanh.pop %v1422
    %1425 = vrot.lane.b32.xlu0 %v1423, 64
    %v1426 = vpop.permute.xlu0 %1425
    %v1428 = vmul.f32 %v1411, %v1426
    %1430 = vrot.lane.b32.xlu0 %v1428, 32
    %v1431 = vpop.permute.xlu0 %1430
    %v1432 = vsel %vm145, %v1431, 0
    %1434 = vmatpush.msra.mxu0 0.0
    %1435 = vmatpush.msra.mxu0 0.0
    %1436 = vmatpush.msra.mxu0 0.0
    %1437 = vmatpush.msra.mxu0 0.0
    %1438 = vmatpush.msra.mxu0 0.0
    %1439 = vmatpush.msra.mxu0 0.0
    %1440 = vmatpush.msra.mxu0 0.0
    %1441 = vmatpush.msra.mxu0 0.0
    %1442 = vmatpush.msra.mxu0 0.0
    %1443 = vmatpush.msra.mxu0 0.0
    %1444 = vmatpush.msra.mxu0 0.0
    %1445 = vmatpush.msra.mxu0 0.0
    %1446 = vmatpush.msra.mxu0 %v1130
    %1447 = vmatpush.msra.mxu0 %v1129
    %1448 = vmatpush.msra.mxu0 %v1128
    %1449 = vmatpush.msra.mxu0 %v1127
    %1450 = vmatmul.f32.gmra.mxu0 %v1432
    %v1451 = vpop.f32.mrf.mxu0
    %v1452 = vadd.f32 0.0, %v1451
    %1453 = vdwg.mxu0
    %v1454 = vadd.f32 %v1149, %v1452
    %v1455 = vmul.f32 %v47, %v1454
    %v1456 = vtanh.pop %v1455
    %v1457 = vmul.f32 %v47, %v1456
    %v1458 = vadd.f32 %v1457, %v48
    %v1459 = vmul.f32 %v1458, %v1422
    %1461 = vrot.lane.b32.xlu0 %v1458, 64
    %v1462 = vpop.permute.xlu0 %1461
    %v1464 = vmul.f32 %v1458, %v1462
    %1466 = vrot.lane.b32.xlu0 %v1464, 32
    %v1467 = vpop.permute.xlu0 %1466
    %v1469 = vadd.f32 %v1459, %v1467
    %v1470 = vtanh.pop %v1469
    %1472 = vrot.lane.b32.xlu0 %v1470, 64
    %v1473 = vpop.permute.xlu0 %1472
    %v1475 = vmul.f32 %v1458, %v1473
    %1477 = vrot.lane.b32.xlu0 %v1475, 32
    %v1478 = vpop.permute.xlu0 %1477
    %v1479 = vsel %vm145, %v1478, 0
    %1481 = vmatpush.msra.mxu0 0.0
    %1482 = vmatpush.msra.mxu0 0.0
    %1483 = vmatpush.msra.mxu0 0.0
    %1484 = vmatpush.msra.mxu0 0.0
    %1485 = vmatpush.msra.mxu0 0.0
    %1486 = vmatpush.msra.mxu0 0.0
    %1487 = vmatpush.msra.mxu0 0.0
    %1488 = vmatpush.msra.mxu0 0.0
    %1489 = vmatpush.msra.mxu0 0.0
    %1490 = vmatpush.msra.mxu0 0.0
    %1491 = vmatpush.msra.mxu0 0.0
    %1492 = vmatpush.msra.mxu0 0.0
    %1493 = vmatpush.msra.mxu0 %v1130
    %1494 = vmatpush.msra.mxu0 %v1129
    %1495 = vmatpush.msra.mxu0 %v1128
    %1496 = vmatpush.msra.mxu0 %v1127
    %1497 = vmatmul.f32.gmra.mxu0 %v1479
    %v1498 = vpop.f32.mrf.mxu0
    %v1499 = vadd.f32 0.0, %v1498
    %1500 = vdwg.mxu0
    %v1501 = vadd.f32 %v1151, %v1499
    %v1502 = vmul.f32 %v47, %v1501
    %v1503 = vtanh.pop %v1502
    %v1504 = vmul.f32 %v47, %v1503
    %v1505 = vadd.f32 %v1504, %v48
    %v1506 = vmul.f32 %v1505, %v1469
    %1508 = vrot.lane.b32.xlu0 %v1505, 64
    %v1509 = vpop.permute.xlu0 %1508
    %v1511 = vmul.f32 %v1505, %v1509
    %1513 = vrot.lane.b32.xlu0 %v1511, 32
    %v1514 = vpop.permute.xlu0 %1513
    %v1516 = vadd.f32 %v1506, %v1514
    %v1517 = vtanh.pop %v1516
    %1519 = vrot.lane.b32.xlu0 %v1517, 64
    %v1520 = vpop.permute.xlu0 %1519
    %v1522 = vmul.f32 %v1505, %v1520
    %v1523 = vsel %vm51, 1, 0
    %vm1524 = vcmp.eq.s32.totalorder %v1523, 1
    %1526 = vrot.lane.b32.xlu0 %v1522, 32
    %v1527 = vpop.permute.xlu0 %1526
    %v1530 = vsel %vm1524, %v1527, %v1196
    %v1531 = vld [vmem:[%s5] sm:$0xff]
    %v1532 = vld [vmem:[%s5 + $0x8] sm:$0xff]
    %v1533 = vld [vmem:[%s5 + $0x10] sm:$0xff]
    %v1534 = vld [vmem:[%s5 + $0x18] sm:$0xff]
    %v1535 = vld [vmem:[%s6] sm:$0x1]
    %v1537 = vperm.slane %v1535, 0
    %v1540 = vsel %vm145, %v1530, 0
    %1542 = vmatpush.msra.mxu0 0.0
    %1543 = vmatpush.msra.mxu0 0.0
    %1544 = vmatpush.msra.mxu0 0.0
    %1545 = vmatpush.msra.mxu0 0.0
    %1546 = vmatpush.msra.mxu0 0.0
    %1547 = vmatpush.msra.mxu0 0.0
    %1548 = vmatpush.msra.mxu0 0.0
    %1549 = vmatpush.msra.mxu0 0.0
    %1550 = vmatpush.msra.mxu0 0.0
    %1551 = vmatpush.msra.mxu0 0.0
    %1552 = vmatpush.msra.mxu0 0.0
    %1553 = vmatpush.msra.mxu0 0.0
    %1554 = vmatpush.msra.mxu0 %v1534
    %1555 = vmatpush.msra.mxu0 %v1533
    %1556 = vmatpush.msra.mxu0 %v1532
    %1557 = vmatpush.msra.mxu0 %v1531
    %1558 = vmatmul.f32.gmra.mxu0 %v1540
    %v1559 = vpop.f32.mrf.mxu0
    %v1560 = vadd.f32 %v1537, %v1559
    %1561 = vdwg.mxu0
    %vm1562 = vcmask 31744
    %1563 = vst.msk [vmem:[%s7] sm:$0xff] %vm1562, %v1560
    // Predicated region
    $region34: #{lstm_predictor_forward.1} parent=1 // pred_check
      _
    $region35: #{lstm_predictor_forward.1} parent=1 // pred_check_branch
      %1565 = sbr.rel (0) target = $region37
    $region36: #{lstm_predictor_forward.1} parent=1 // pred_region
      _
    $region37: #{lstm_predictor_forward.1} parent=1 // pred_fallthru
      _
    // Predicated region
    $region38: #{lstm_predictor_forward.1} parent=1 // pred_check
      _
    $region39: #{lstm_predictor_forward.1} parent=1 // pred_check_branch
      %1567 = sbr.rel (0) target = $region41
    $region40: #{lstm_predictor_forward.1} parent=1 // pred_region
      _
    $region41: #{lstm_predictor_forward.1} parent=1 // pred_fallthru
      _
    %1568 = vsyncpa [#allocation3], 1

</llo_original>
